<compile_context>
chip_gen: v7x
topology: tpu7x:2x2x1
jax: 0.10.0
libtpu: 0.0.40
codegen_flags: <defaults>
</compile_context>

<pallas_src>
import functools

import numpy as np
import jax
import jax.numpy as jnp
from jax import lax
from jax.experimental import pallas as pl
from jax.experimental.pallas import tpu as pltpu


_LANES = 128
_SUBLANES = 8
# VMEM budget for the double-buffered HBM->VMEM input streams, and the Mosaic
# scoped-VMEM limit.  40 MiB stays within v7x's 64 MiB physical VMEM (review:
# keep <= ~48 MiB there) and is far under v5e/v6e's 128 MiB.
_STREAM_VMEM_BUDGET = 28 * 1024 * 1024
_VMEM_LIMIT_BYTES = 40 * 1024 * 1024


def _round_up(x, m):
    return ((x + m - 1) // m) * m


def _contrastive_loss_kernel(o1_ref, o2_ref, t_ref, out_ref, *, margin, n_rows, chunk):
    """One grid step: rows [i*tt, (i+1)*tt) of the batch, streamed into VMEM.

    The tile is processed in `chunk`-row slices inside a fori_loop so compute
    temporaries stay tiny regardless of the DMA tile size, and the per-row
    losses are reduced to a single per-tile partial sum written as one
    lane-dense (8, 128) block.  Rows past the logical batch (ragged last tile)
    contain uninitialized VMEM and are masked with a select.
    """
    i = pl.program_id(0)
    tt = o1_ref.shape[0]
    n_chunks = tt // chunk                                    # static
    # Number of valid rows in this tile (== tt except possibly the last tile).
    limit = jnp.minimum(jnp.int32(n_rows) - i * tt, tt)

    def body(c, acc):
        base = pl.multiple_of(c * chunk, chunk)
        d1 = o1_ref[pl.ds(base, chunk), :].astype(jnp.float32)     # (chunk, D)
        d2 = o2_ref[pl.ds(base, chunk), :].astype(jnp.float32)     # (chunk, D)
        diff = d2 - d1
        dist = jnp.sum(diff * diff, axis=1, keepdims=True)         # (chunk, 1)
        t = t_ref[pl.ds(base, chunk), :].astype(jnp.float32)       # (chunk, 1)
        hinge = jnp.maximum(margin - jnp.sqrt(dist), 0.0)
        losses = 0.5 * (t * dist + (1.0 - t) * hinge * hinge)      # (chunk, 1)
        # Rows beyond the valid batch may hold garbage/NaN -> select, not multiply.
        row = base + lax.broadcasted_iota(jnp.int32, (chunk, 1), 0)
        masked = jnp.where(row < limit, losses, 0.0)
        return acc + jnp.sum(masked, axis=0, keepdims=True)        # (1, 1)

    acc = lax.fori_loop(0, n_chunks, body, jnp.zeros((1, 1), jnp.float32))
    # Lane-dense, unmasked (8, 128) store; the wrapper reads element [0, 0]
    # of each tile's block.
    out_ref[...] = jnp.broadcast_to(acc, out_ref.shape)


def contrastive_loss(output1, output2, target, margin, size_average=True,
                     block_rows=None, core_parallel=False):
    """Pallas equivalent of ContrastiveLoss(margin).forward(output1, output2, target)."""
    N, D = output1.shape
    if N == 0:  # guard degenerate batch (avoids 0/0)
        return jnp.float32(0.0)

    # Narrow-dtype target stream (review): integer/bool 0-1 labels are exact in
    # bfloat16; floating targets keep their caller dtype.  The kernel upcasts
    # to f32 internally.
    if jnp.issubdtype(target.dtype, jnp.floating):
        t = target.reshape(N, 1)
    else:
        t = target.reshape(N, 1).astype(jnp.bfloat16)

    emb_itemsize = max(jnp.dtype(output1.dtype).itemsize,
                       jnp.dtype(output2.dtype).itemsize)
    t_itemsize = jnp.dtype(t.dtype).itemsize
    d_pad = _round_up(D, _LANES)

    # Row-tile size from the VMEM stream budget: 2 double-buffered embedding
    # streams + the lane-padded (tt, 1) target stream.  Multiples of 512 keep
    # every dtype's sublane packing happy and always divide by the inner chunk.
    bytes_per_row = 2 * (2 * d_pad * emb_itemsize) + 2 * (_LANES * t_itemsize)
    tt = max(512, (_STREAM_VMEM_BUDGET // bytes_per_row) // 512 * 512)
    tt = min(tt, _round_up(N, 512))
    if block_rows is not None:
        tt = min(tt, max(512, _round_up(int(block_rows), 512)))

    # Inner compute-chunk: keep temporaries <= ~1 MiB; a power of two, so it
    # always divides tt (a multiple of 512).
    chunk = 512
    while chunk > 8 and chunk * d_pad * 4 > (1 << 20):
        chunk //= 2

    num_tiles = (N + tt - 1) // tt

    kernel = functools.partial(_contrastive_loss_kernel,
                               margin=float(margin),
                               n_rows=int(N),
                               chunk=int(chunk))

    emb_spec = pl.BlockSpec((tt, D), lambda i: (i, 0))
    tgt_spec = pl.BlockSpec((tt, 1), lambda i: (i, 0))
    out_spec = pl.BlockSpec((_SUBLANES, _LANES), lambda i: (i, 0))

    cost = pl.CostEstimate(
        flops=int(3 * N * D + 10 * N),
        transcendentals=int(N),
        bytes_accessed=int(N * D * (jnp.dtype(output1.dtype).itemsize
                                    + jnp.dtype(output2.dtype).itemsize)
                           + N * t_itemsize
                           + num_tiles * _SUBLANES * _LANES * 4),
    )

    # On v7x, pass core_parallel=True so CORE_PARALLEL shards the single grid
    # axis across both TensorCores; "parallel" is the portable default.
    semantics = (pltpu.CORE_PARALLEL,) if core_parallel else ("parallel",)

    partial_sums = pl.pallas_call(
        kernel,
        out_shape=jax.ShapeDtypeStruct((num_tiles * _SUBLANES, _LANES), jnp.float32),
        grid_spec=pltpu.PrefetchScalarGridSpec(
            num_scalar_prefetch=0,
            grid=(num_tiles,),
            in_specs=[emb_spec, emb_spec, tgt_spec],
            out_specs=out_spec,
        ),
        compiler_params=pltpu.CompilerParams(
            dimension_semantics=semantics,
            vmem_limit_bytes=_VMEM_LIMIT_BYTES,
        ),
        cost_estimate=cost,
    )(output1, output2, t)

    total = jnp.sum(partial_sums[::_SUBLANES, 0])   # num_tiles scalars -> one value
    return total / N if size_average else total


def _reference(o1, o2, t, margin, size_average=True):
    """Pure-JAX mirror of the PyTorch forward."""
    o1 = o1.astype(jnp.float32)
    o2 = o2.astype(jnp.float32)
    t = t.astype(jnp.float32)
    d = jnp.sum((o2 - o1) ** 2, axis=1)
    losses = 0.5 * (t * d + (1.0 - t) * jnp.maximum(margin - jnp.sqrt(d), 0.0) ** 2)
    return jnp.mean(losses) if size_average else jnp.sum(losses)


if __name__ == "__main__":
    key = jax.random.PRNGKey(0)
    keys = jax.random.split(key, 8)
    margin = 1.0
    D = 128

    # 1) tiny batch (single ragged tile), f32 embeddings, integer labels, mean
    N1 = 13
    o1a = jax.random.normal(keys[0], (N1, D), dtype=jnp.float32)
    o2a = jax.random.normal(keys[1], (N1, D), dtype=jnp.float32)
    ta = (jax.random.uniform(keys[2], (N1,)) < 0.5).astype(jnp.int32)
    got = jax.block_until_ready(contrastive_loss(o1a, o2a, ta, margin))
    np.testing.assert_allclose(np.asarray(got),
                               np.asarray(_reference(o1a, o2a, ta, margin)),
                               rtol=1e-5, atol=1e-5)

    # 2) multi-tile path with a ragged last tile (no wrapper padding), sum
    N2 = 1300
    o1b = jax.random.normal(keys[3], (N2, D), dtype=jnp.float32)
    o2b = jax.random.normal(keys[4], (N2, D), dtype=jnp.float32)
    tb = (jax.random.uniform(keys[5], (N2,)) < 0.5).astype(jnp.int32)
    got = jax.block_until_ready(
        contrastive_loss(o1b, o2b, tb, margin, size_average=False, block_rows=512))
    np.testing.assert_allclose(
        np.asarray(got),
        np.asarray(_reference(o1b, o2b, tb, margin, size_average=False)),
        rtol=1e-5, atol=1e-5)

    # 3) bf16 embeddings (half the HBM traffic; kernel upcasts to f32 internally)
    o1c = o1b.astype(jnp.bfloat16)
    o2c = o2b.astype(jnp.bfloat16)
    got = jax.block_until_ready(contrastive_loss(o1c, o2c, tb, margin))
    np.testing.assert_allclose(np.asarray(got),
                               np.asarray(_reference(o1c, o2c, tb, margin)),
                               rtol=1e-5, atol=1e-5)

    # 4) floating-point target (kept in caller dtype, no narrowing)
    tf = jax.random.uniform(keys[6], (N1,), dtype=jnp.float32)
    got = jax.block_until_ready(contrastive_loss(o1a, o2a, tf, margin))
    np.testing.assert_allclose(np.asarray(got),
                               np.asarray(_reference(o1a, o2a, tf, margin)),
                               rtol=1e-5, atol=1e-5)

    print("KERNEL_OK")
</pallas_src>

<mosaic_0001>
module attributes {stable_mosaic.version = 11 : i64} {
  func.func @_contrastive_loss_kernel(%arg0: i32, %arg1: memref<512x128xf32, #tpu.memory_space<vmem>>, %arg2: memref<512x128xf32, #tpu.memory_space<vmem>>, %arg3: memref<512x1xbf16, #tpu.memory_space<vmem>>, %arg4: memref<8x128xf32, #tpu.memory_space<vmem>>) attributes {dimension_semantics = [#tpu.dimension_semantics<parallel>], iteration_bounds = array<i64: 1>, scalar_prefetch = 0 : i64, scratch_operands = 0 : i64, tpu.core_type = #tpu.core_type<tc>, window_params = [{transform_indices = @transform_0, window_bounds = array<i64: 512, 128>}, {transform_indices = @transform_1, window_bounds = array<i64: 512, 128>}, {transform_indices = @transform_2, window_bounds = array<i64: 512, 1>}, {transform_indices = @transform_3, window_bounds = array<i64: 8, 128>}]} {
    %c512_i32 = arith.constant 512 : i32
    %0 = arith.muli %arg0, %c512_i32 : i32
    %c13_i32 = arith.constant 13 : i32
    %1 = arith.subi %c13_i32, %0 : i32
    %c512_i32_0 = arith.constant 512 : i32
    %2 = arith.minsi %1, %c512_i32_0 : i32
    %cst = arith.constant 0.000000e+00 : f32
    %3 = vector.broadcast %cst : f32 to vector<1x1xf32>
    %c0_i32 = arith.constant 0 : i32
    %c512_i32_1 = arith.constant 512 : i32
    %4 = arith.muli %c0_i32, %c512_i32_1 : i32
    %5 = tpu.assume_multiple %4, 512 : i32
    %6 = arith.index_cast %5 : i32 to index
    %c0 = arith.constant 0 : index
    %7 = vector.load %arg1[%6, %c0] : memref<512x128xf32, #tpu.memory_space<vmem>>, vector<512x128xf32>
    %8 = arith.index_cast %5 : i32 to index
    %c0_2 = arith.constant 0 : index
    %9 = vector.load %arg2[%8, %c0_2] : memref<512x128xf32, #tpu.memory_space<vmem>>, vector<512x128xf32>
    %10 = arith.subf %9, %7 : vector<512x128xf32>
    %11 = arith.mulf %10, %10 : vector<512x128xf32>
    %cst_3 = arith.constant dense<0.000000e+00> : vector<512xf32>
    %12 = vector.multi_reduction <add>, %11, %cst_3 [1] : vector<512x128xf32> to vector<512xf32>
    %13 = vector.shape_cast %12 : vector<512xf32> to vector<512x1xf32>
    %14 = arith.index_cast %5 : i32 to index
    %c0_4 = arith.constant 0 : index
    %15 = vector.load %arg3[%14, %c0_4] : memref<512x1xbf16, #tpu.memory_space<vmem>>, vector<512x1xbf16>
    %16 = arith.extf %15 : vector<512x1xbf16> to vector<512x1xf32>
    %17 = math.sqrt %13 : vector<512x1xf32>
    %cst_5 = arith.constant 1.000000e+00 : f32
    %18 = vector.broadcast %cst_5 : f32 to vector<512x1xf32>
    %19 = arith.subf %18, %17 : vector<512x1xf32>
    %cst_6 = arith.constant 0.000000e+00 : f32
    %20 = vector.broadcast %cst_6 : f32 to vector<512x1xf32>
    %21 = arith.maximumf %19, %20 : vector<512x1xf32>
    %22 = arith.mulf %16, %13 : vector<512x1xf32>
    %cst_7 = arith.constant 1.000000e+00 : f32
    %23 = vector.broadcast %cst_7 : f32 to vector<512x1xf32>
    %24 = arith.subf %23, %16 : vector<512x1xf32>
    %25 = arith.mulf %24, %21 : vector<512x1xf32>
    %26 = arith.mulf %25, %21 : vector<512x1xf32>
    %27 = arith.addf %22, %26 : vector<512x1xf32>
    %cst_8 = arith.constant 5.000000e-01 : f32
    %28 = vector.broadcast %cst_8 : f32 to vector<512x1xf32>
    %29 = arith.mulf %28, %27 : vector<512x1xf32>
    %30 = tpu.iota {dimensions = array<i32: 0>} : vector<512x1xi32>
    %31 = vector.broadcast %5 : i32 to vector<512x1xi32>
    %32 = arith.addi %31, %30 : vector<512x1xi32>
    %33 = vector.broadcast %2 : i32 to vector<512x1xi32>
    %34 = arith.cmpi slt, %32, %33 : vector<512x1xi32>
    %cst_9 = arith.constant 0.000000e+00 : f32
    %35 = vector.broadcast %cst_9 : f32 to vector<512x1xf32>
    %36 = arith.select %34, %29, %35 : vector<512x1xi1>, vector<512x1xf32>
    %cst_10 = arith.constant dense<0.000000e+00> : vector<1xf32>
    %37 = vector.multi_reduction <add>, %36, %cst_10 [0] : vector<512x1xf32> to vector<1xf32>
    %38 = vector.shape_cast %37 : vector<1xf32> to vector<1x1xf32>
    %39 = arith.addf %3, %38 : vector<1x1xf32>
    %c1_i32 = arith.constant 1 : i32
    %40 = vector.shape_cast %39 : vector<1x1xf32> to vector<1x1xf32>
    %41 = vector.broadcast %40 : vector<1x1xf32> to vector<8x128xf32>
    %c0_11 = arith.constant 0 : index
    %c0_12 = arith.constant 0 : index
    %42 = vector.load %arg4[%c0_11, %c0_12] : memref<8x128xf32, #tpu.memory_space<vmem>>, vector<8x128xf32>
    tpu.vector_store %arg4[%c0_11, %c0_12], %41 {strides = array<i32>} : memref<8x128xf32, #tpu.memory_space<vmem>>, vector<8x128xf32>,
    return
  }
  func.func @transform_0(%arg0: i32) -> (i32, i32) {
    %c0_i32 = arith.constant 0 : i32
    %c0_i32_0 = arith.constant 0 : i32
    return %arg0, %c0_i32 : i32, i32
  }
  func.func @transform_1(%arg0: i32) -> (i32, i32) {
    %c0_i32 = arith.constant 0 : i32
    %c0_i32_0 = arith.constant 0 : i32
    return %arg0, %c0_i32 : i32, i32
  }
  func.func @transform_2(%arg0: i32) -> (i32, i32) {
    %c0_i32 = arith.constant 0 : i32
    %c0_i32_0 = arith.constant 0 : i32
    return %arg0, %c0_i32 : i32, i32
  }
  func.func @transform_3(%arg0: i32) -> (i32, i32) {
    %c0_i32 = arith.constant 0 : i32
    %c0_i32_0 = arith.constant 0 : i32
    return %arg0, %c0_i32 : i32, i32
  }
}

</mosaic_0001>

<llo_original>
// kernel: tpu_custom_call.1
$region0: #{tpu_custom_call.1}
  #allocation0 [shape = 'u32[]', space=smem, size = 0x4, offset = 0x4, fixed_abs, tag = 'smem constant byte address 0x4 - core index']
  #allocation1 [shape = 'u32[144,128]{1,0:T(1,128)}', space=vmem, size = 0x12000, scoped, tag = 'internal scratch']
  %s0 = inlined_call_operand.hbm [shape: f32[13,128], index: 0, kind: input, shape index: {}]
  %s1 = inlined_call_operand.hbm [shape: f32[13,128], index: 1, kind: input, shape index: {}]
  %s2 = inlined_call_operand.vmem [shape: bf16[13,1], index: 2, kind: input, shape index: {}]
  %s3 = inlined_call_operand.hbm [shape: f32[8,128], index: 3, kind: output, shape index: {}]
  %s4 = sld [smem:[#allocation0]]
  $region30: #{tpu_custom_call.1} parent=0
    _
  %s6 = ssub.s32 1, %s4
  %s7 = scalar_select 0, %s6, %s4
  $region1: #{tpu_custom_call.1} parent=0
    #allocation2 [shape = 'u8[262144]{0}', space=vmem, size = 0x40000, scoped, tag = 'input window, operand 0, single buffered']
    #allocation3 [shape = 's32[1]{0}', space=sflag, size = 0x4, scoped, tag = 'scoped memory for tpu_custom_call.1']
    #allocation4 [shape = 's32[1]{0}', space=sflag, size = 0x4, scoped, tag = 'scoped memory for tpu_custom_call.1']
    #allocation5 [shape = 'u8[262144]{0}', space=vmem, size = 0x40000, scoped, tag = 'input window, operand 1, single buffered']
    #allocation6 [shape = 's32[1]{0}', space=sflag, size = 0x4, scoped, tag = 'scoped memory for tpu_custom_call.1']
    #allocation7 [shape = 'u8[4096]{0}', space=vmem, size = 0x1000, scoped, tag = 'output window, operand 0, single buffered']
    %8 = vsyncpa [#allocation3], 0
    %9 = vsyncpa [#allocation6], 0
    %10 = vsyncpa [#allocation4], 0
    // Predicated region
    $region2: #{tpu_custom_call.1} parent=1 // pred_check
      _
    $region3: #{tpu_custom_call.1} parent=1 // pred_check_branch
      %12 = sbr.rel (0) target = $region5
    $region4: #{tpu_custom_call.1} parent=1 // pred_region
      %s14 = ssub.s32 8192, 256
      %15 = vsyncadd [#allocation3], %s14
      %s16 = sshll.u32 [#allocation2], 4
      %s17 = int_to_ptr.vmem [resolvable:$true] %s16
      %22 = dma.hbm_to_vmem [thread:$0]  %s0, 256, %s17, [#allocation3], 128, 128, 8
    $region5: #{tpu_custom_call.1} parent=1 // pred_fallthru
      _
    // Predicated region
    $region6: #{tpu_custom_call.1} parent=1 // pred_check
      _
    $region7: #{tpu_custom_call.1} parent=1 // pred_check_branch
      %24 = sbr.rel (0) target = $region9
    $region8: #{tpu_custom_call.1} parent=1 // pred_region
      %s26 = ssub.s32 8192, 256
      %27 = vsyncadd [#allocation6], %s26
      %s28 = sshll.u32 [#allocation5], 4
      %s29 = int_to_ptr.vmem [resolvable:$true] %s28
      %34 = dma.hbm_to_vmem [thread:$0]  %s1, 256, %s29, [#allocation6], 128, 128, 8
    $region9: #{tpu_custom_call.1} parent=1 // pred_fallthru
      _
    // Predicated region
    $region10: #{tpu_custom_call.1} parent=1 // pred_check
      _
    $region11: #{tpu_custom_call.1} parent=1 // pred_check_branch
      %36 = sbr.rel (0) target = $region13
    $region12: #{tpu_custom_call.1} parent=1 // pred_region
      _
    $region13: #{tpu_custom_call.1} parent=1 // pred_fallthru
      _
    // Predicated region
    $region14: #{tpu_custom_call.1} parent=1 // pred_check
      _
    $region15: #{tpu_custom_call.1} parent=1 // pred_check_branch
      %38 = sbr.rel (0) target = $region17
    $region16: #{tpu_custom_call.1} parent=1 // pred_region
      %39 = dma.done [#allocation3], 8192
    $region17: #{tpu_custom_call.1} parent=1 // pred_fallthru
      _
    // Predicated region
    $region18: #{tpu_custom_call.1} parent=1 // pred_check
      _
    $region19: #{tpu_custom_call.1} parent=1 // pred_check_branch
      %41 = sbr.rel (0) target = $region21
    $region20: #{tpu_custom_call.1} parent=1 // pred_region
      %42 = dma.done [#allocation6], 8192
    $region21: #{tpu_custom_call.1} parent=1 // pred_fallthru
      _
    %s43 = smul.u32 0, 512
    %s44 = ssub.s32 13, %s43
    %p45 = scmp.lt.s32.totalorder %s44, 512
    %s46 = scalar_select %p45, %s44, 512
    %v47 = vld [vmem:[#allocation2] sm:$0xff]
    %v48 = vld [vmem:[#allocation2 + $0x8] sm:$0xff]
    %v49 = vld [vmem:[#allocation2 + $0x10] sm:$0xff]
    %v50 = vld [vmem:[#allocation2 + $0x18] sm:$0xff]
    %v51 = vld [vmem:[#allocation2 + $0x20] sm:$0xff]
    %v52 = vld [vmem:[#allocation2 + $0x28] sm:$0xff]
    %v53 = vld [vmem:[#allocation2 + $0x30] sm:$0xff]
    %v54 = vld [vmem:[#allocation2 + $0x38] sm:$0xff]
    %v55 = vld [vmem:[#allocation2 + $0x40] sm:$0xff]
    %v56 = vld [vmem:[#allocation2 + $0x48] sm:$0xff]
    %v57 = vld [vmem:[#allocation2 + $0x50] sm:$0xff]
    %v58 = vld [vmem:[#allocation2 + $0x58] sm:$0xff]
    %v59 = vld [vmem:[#allocation2 + $0x60] sm:$0xff]
    %v60 = vld [vmem:[#allocation2 + $0x68] sm:$0xff]
    %v61 = vld [vmem:[#allocation2 + $0x70] sm:$0xff]
    %v62 = vld [vmem:[#allocation2 + $0x78] sm:$0xff]
    %v63 = vld [vmem:[#allocation2 + $0x80] sm:$0xff]
    %v64 = vld [vmem:[#allocation2 + $0x88] sm:$0xff]
    %v65 = vld [vmem:[#allocation2 + $0x90] sm:$0xff]
    %v66 = vld [vmem:[#allocation2 + $0x98] sm:$0xff]
    %v67 = vld [vmem:[#allocation2 + $0xa0] sm:$0xff]
    %v68 = vld [vmem:[#allocation2 + $0xa8] sm:$0xff]
    %v69 = vld [vmem:[#allocation2 + $0xb0] sm:$0xff]
    %v70 = vld [vmem:[#allocation2 + $0xb8] sm:$0xff]
    %v71 = vld [vmem:[#allocation2 + $0xc0] sm:$0xff]
    %v72 = vld [vmem:[#allocation2 + $0xc8] sm:$0xff]
    %v73 = vld [vmem:[#allocation2 + $0xd0] sm:$0xff]
    %v74 = vld [vmem:[#allocation2 + $0xd8] sm:$0xff]
    %v75 = vld [vmem:[#allocation2 + $0xe0] sm:$0xff]
    %v76 = vld [vmem:[#allocation2 + $0xe8] sm:$0xff]
    %v77 = vld [vmem:[#allocation2 + $0xf0] sm:$0xff]
    %v78 = vld [vmem:[#allocation2 + $0xf8] sm:$0xff]
    %v79 = vld [vmem:[#allocation2 + $0x100] sm:$0xff]
    %v80 = vld [vmem:[#allocation2 + $0x108] sm:$0xff]
    %v81 = vld [vmem:[#allocation2 + $0x110] sm:$0xff]
    %v82 = vld [vmem:[#allocation2 + $0x118] sm:$0xff]
    %v83 = vld [vmem:[#allocation2 + $0x120] sm:$0xff]
    %v84 = vld [vmem:[#allocation2 + $0x128] sm:$0xff]
    %v85 = vld [vmem:[#allocation2 + $0x130] sm:$0xff]
    %v86 = vld [vmem:[#allocation2 + $0x138] sm:$0xff]
    %v87 = vld [vmem:[#allocation2 + $0x140] sm:$0xff]
    %v88 = vld [vmem:[#allocation2 + $0x148] sm:$0xff]
    %v89 = vld [vmem:[#allocation2 + $0x150] sm:$0xff]
    %v90 = vld [vmem:[#allocation2 + $0x158] sm:$0xff]
    %v91 = vld [vmem:[#allocation2 + $0x160] sm:$0xff]
    %v92 = vld [vmem:[#allocation2 + $0x168] sm:$0xff]
    %v93 = vld [vmem:[#allocation2 + $0x170] sm:$0xff]
    %v94 = vld [vmem:[#allocation2 + $0x178] sm:$0xff]
    %v95 = vld [vmem:[#allocation2 + $0x180] sm:$0xff]
    %v96 = vld [vmem:[#allocation2 + $0x188] sm:$0xff]
    %v97 = vld [vmem:[#allocation2 + $0x190] sm:$0xff]
    %v98 = vld [vmem:[#allocation2 + $0x198] sm:$0xff]
    %v99 = vld [vmem:[#allocation2 + $0x1a0] sm:$0xff]
    %v100 = vld [vmem:[#allocation2 + $0x1a8] sm:$0xff]
    %v101 = vld [vmem:[#allocation2 + $0x1b0] sm:$0xff]
    %v102 = vld [vmem:[#allocation2 + $0x1b8] sm:$0xff]
    %v103 = vld [vmem:[#allocation2 + $0x1c0] sm:$0xff]
    %v104 = vld [vmem:[#allocation2 + $0x1c8] sm:$0xff]
    %v105 = vld [vmem:[#allocation2 + $0x1d0] sm:$0xff]
    %v106 = vld [vmem:[#allocation2 + $0x1d8] sm:$0xff]
    %v107 = vld [vmem:[#allocation2 + $0x1e0] sm:$0xff]
    %v108 = vld [vmem:[#allocation2 + $0x1e8] sm:$0xff]
    %v109 = vld [vmem:[#allocation2 + $0x1f0] sm:$0xff]
    %v110 = vld [vmem:[#allocation2 + $0x1f8] sm:$0xff]
    %v111 = vld [vmem:[#allocation5] sm:$0xff]
    %v112 = vld [vmem:[#allocation5 + $0x8] sm:$0xff]
    %v113 = vld [vmem:[#allocation5 + $0x10] sm:$0xff]
    %v114 = vld [vmem:[#allocation5 + $0x18] sm:$0xff]
    %v115 = vld [vmem:[#allocation5 + $0x20] sm:$0xff]
    %v116 = vld [vmem:[#allocation5 + $0x28] sm:$0xff]
    %v117 = vld [vmem:[#allocation5 + $0x30] sm:$0xff]
    %v118 = vld [vmem:[#allocation5 + $0x38] sm:$0xff]
    %v119 = vld [vmem:[#allocation5 + $0x40] sm:$0xff]
    %v120 = vld [vmem:[#allocation5 + $0x48] sm:$0xff]
    %v121 = vld [vmem:[#allocation5 + $0x50] sm:$0xff]
    %v122 = vld [vmem:[#allocation5 + $0x58] sm:$0xff]
    %v123 = vld [vmem:[#allocation5 + $0x60] sm:$0xff]
    %v124 = vld [vmem:[#allocation5 + $0x68] sm:$0xff]
    %v125 = vld [vmem:[#allocation5 + $0x70] sm:$0xff]
    %v126 = vld [vmem:[#allocation5 + $0x78] sm:$0xff]
    %v127 = vld [vmem:[#allocation5 + $0x80] sm:$0xff]
    %v128 = vld [vmem:[#allocation5 + $0x88] sm:$0xff]
    %v129 = vld [vmem:[#allocation5 + $0x90] sm:$0xff]
    %v130 = vld [vmem:[#allocation5 + $0x98] sm:$0xff]
    %v131 = vld [vmem:[#allocation5 + $0xa0] sm:$0xff]
    %v132 = vld [vmem:[#allocation5 + $0xa8] sm:$0xff]
    %v133 = vld [vmem:[#allocation5 + $0xb0] sm:$0xff]
    %v134 = vld [vmem:[#allocation5 + $0xb8] sm:$0xff]
    %v135 = vld [vmem:[#allocation5 + $0xc0] sm:$0xff]
    %v136 = vld [vmem:[#allocation5 + $0xc8] sm:$0xff]
    %v137 = vld [vmem:[#allocation5 + $0xd0] sm:$0xff]
    %v138 = vld [vmem:[#allocation5 + $0xd8] sm:$0xff]
    %v139 = vld [vmem:[#allocation5 + $0xe0] sm:$0xff]
    %v140 = vld [vmem:[#allocation5 + $0xe8] sm:$0xff]
    %v141 = vld [vmem:[#allocation5 + $0xf0] sm:$0xff]
    %v142 = vld [vmem:[#allocation5 + $0xf8] sm:$0xff]
    %v143 = vld [vmem:[#allocation5 + $0x100] sm:$0xff]
    %v144 = vld [vmem:[#allocation5 + $0x108] sm:$0xff]
    %v145 = vld [vmem:[#allocation5 + $0x110] sm:$0xff]
    %v146 = vld [vmem:[#allocation5 + $0x118] sm:$0xff]
    %v147 = vld [vmem:[#allocation5 + $0x120] sm:$0xff]
    %v148 = vld [vmem:[#allocation5 + $0x128] sm:$0xff]
    %v149 = vld [vmem:[#allocation5 + $0x130] sm:$0xff]
    %v150 = vld [vmem:[#allocation5 + $0x138] sm:$0xff]
    %v151 = vld [vmem:[#allocation5 + $0x140] sm:$0xff]
    %v152 = vld [vmem:[#allocation5 + $0x148] sm:$0xff]
    %v153 = vld [vmem:[#allocation5 + $0x150] sm:$0xff]
    %v154 = vld [vmem:[#allocation5 + $0x158] sm:$0xff]
    %v155 = vld [vmem:[#allocation5 + $0x160] sm:$0xff]
    %v156 = vld [vmem:[#allocation5 + $0x168] sm:$0xff]
    %v157 = vld [vmem:[#allocation5 + $0x170] sm:$0xff]
    %v158 = vld [vmem:[#allocation5 + $0x178] sm:$0xff]
    %v159 = vld [vmem:[#allocation5 + $0x180] sm:$0xff]
    %v160 = vld [vmem:[#allocation5 + $0x188] sm:$0xff]
    %v161 = vld [vmem:[#allocation5 + $0x190] sm:$0xff]
    %v162 = vld [vmem:[#allocation5 + $0x198] sm:$0xff]
    %v163 = vld [vmem:[#allocation5 + $0x1a0] sm:$0xff]
    %v164 = vld [vmem:[#allocation5 + $0x1a8] sm:$0xff]
    %v165 = vld [vmem:[#allocation5 + $0x1b0] sm:$0xff]
    %v166 = vld [vmem:[#allocation5 + $0x1b8] sm:$0xff]
    %v167 = vld [vmem:[#allocation5 + $0x1c0] sm:$0xff]
    %v168 = vld [vmem:[#allocation5 + $0x1c8] sm:$0xff]
    %v169 = vld [vmem:[#allocation5 + $0x1d0] sm:$0xff]
    %v170 = vld [vmem:[#allocation5 + $0x1d8] sm:$0xff]
    %v171 = vld [vmem:[#allocation5 + $0x1e0] sm:$0xff]
    %v172 = vld [vmem:[#allocation5 + $0x1e8] sm:$0xff]
    %v173 = vld [vmem:[#allocation5 + $0x1f0] sm:$0xff]
    %v174 = vld [vmem:[#allocation5 + $0x1f8] sm:$0xff]
    %v175 = vsub.f32 %v111, %v47
    %v176 = vsub.f32 %v112, %v48
    %v177 = vsub.f32 %v113, %v49
    %v178 = vsub.f32 %v114, %v50
    %v179 = vsub.f32 %v115, %v51
    %v180 = vsub.f32 %v116, %v52
    %v181 = vsub.f32 %v117, %v53
    %v182 = vsub.f32 %v118, %v54
    %v183 = vsub.f32 %v119, %v55
    %v184 = vsub.f32 %v120, %v56
    %v185 = vsub.f32 %v121, %v57
    %v186 = vsub.f32 %v122, %v58
    %v187 = vsub.f32 %v123, %v59
    %v188 = vsub.f32 %v124, %v60
    %v189 = vsub.f32 %v125, %v61
    %v190 = vsub.f32 %v126, %v62
    %v191 = vsub.f32 %v127, %v63
    %v192 = vsub.f32 %v128, %v64
    %v193 = vsub.f32 %v129, %v65
    %v194 = vsub.f32 %v130, %v66
    %v195 = vsub.f32 %v131, %v67
    %v196 = vsub.f32 %v132, %v68
    %v197 = vsub.f32 %v133, %v69
    %v198 = vsub.f32 %v134, %v70
    %v199 = vsub.f32 %v135, %v71
    %v200 = vsub.f32 %v136, %v72
    %v201 = vsub.f32 %v137, %v73
    %v202 = vsub.f32 %v138, %v74
    %v203 = vsub.f32 %v139, %v75
    %v204 = vsub.f32 %v140, %v76
    %v205 = vsub.f32 %v141, %v77
    %v206 = vsub.f32 %v142, %v78
    %v207 = vsub.f32 %v143, %v79
    %v208 = vsub.f32 %v144, %v80
    %v209 = vsub.f32 %v145, %v81
    %v210 = vsub.f32 %v146, %v82
    %v211 = vsub.f32 %v147, %v83
    %v212 = vsub.f32 %v148, %v84
    %v213 = vsub.f32 %v149, %v85
    %v214 = vsub.f32 %v150, %v86
    %v215 = vsub.f32 %v151, %v87
    %v216 = vsub.f32 %v152, %v88
    %v217 = vsub.f32 %v153, %v89
    %v218 = vsub.f32 %v154, %v90
    %v219 = vsub.f32 %v155, %v91
    %v220 = vsub.f32 %v156, %v92
    %v221 = vsub.f32 %v157, %v93
    %v222 = vsub.f32 %v158, %v94
    %v223 = vsub.f32 %v159, %v95
    %v224 = vsub.f32 %v160, %v96
    %v225 = vsub.f32 %v161, %v97
    %v226 = vsub.f32 %v162, %v98
    %v227 = vsub.f32 %v163, %v99
    %v228 = vsub.f32 %v164, %v100
    %v229 = vsub.f32 %v165, %v101
    %v230 = vsub.f32 %v166, %v102
    %v231 = vsub.f32 %v167, %v103
    %v232 = vsub.f32 %v168, %v104
    %v233 = vsub.f32 %v169, %v105
    %v234 = vsub.f32 %v170, %v106
    %v235 = vsub.f32 %v171, %v107
    %v236 = vsub.f32 %v172, %v108
    %v237 = vsub.f32 %v173, %v109
    %v238 = vsub.f32 %v174, %v110
    %v239 = vmul.f32 %v175, %v175
    %v240 = vmul.f32 %v176, %v176
    %v241 = vmul.f32 %v177, %v177
    %v242 = vmul.f32 %v178, %v178
    %v243 = vmul.f32 %v179, %v179
    %v244 = vmul.f32 %v180, %v180
    %v245 = vmul.f32 %v181, %v181
    %v246 = vmul.f32 %v182, %v182
    %v247 = vmul.f32 %v183, %v183
    %v248 = vmul.f32 %v184, %v184
    %v249 = vmul.f32 %v185, %v185
    %v250 = vmul.f32 %v186, %v186
    %v251 = vmul.f32 %v187, %v187
    %v252 = vmul.f32 %v188, %v188
    %v253 = vmul.f32 %v189, %v189
    %v254 = vmul.f32 %v190, %v190
    %v255 = vmul.f32 %v191, %v191
    %v256 = vmul.f32 %v192, %v192
    %v257 = vmul.f32 %v193, %v193
    %v258 = vmul.f32 %v194, %v194
    %v259 = vmul.f32 %v195, %v195
    %v260 = vmul.f32 %v196, %v196
    %v261 = vmul.f32 %v197, %v197
    %v262 = vmul.f32 %v198, %v198
    %v263 = vmul.f32 %v199, %v199
    %v264 = vmul.f32 %v200, %v200
    %v265 = vmul.f32 %v201, %v201
    %v266 = vmul.f32 %v202, %v202
    %v267 = vmul.f32 %v203, %v203
    %v268 = vmul.f32 %v204, %v204
    %v269 = vmul.f32 %v205, %v205
    %v270 = vmul.f32 %v206, %v206
    %v271 = vmul.f32 %v207, %v207
    %v272 = vmul.f32 %v208, %v208
    %v273 = vmul.f32 %v209, %v209
    %v274 = vmul.f32 %v210, %v210
    %v275 = vmul.f32 %v211, %v211
    %v276 = vmul.f32 %v212, %v212
    %v277 = vmul.f32 %v213, %v213
    %v278 = vmul.f32 %v214, %v214
    %v279 = vmul.f32 %v215, %v215
    %v280 = vmul.f32 %v216, %v216
    %v281 = vmul.f32 %v217, %v217
    %v282 = vmul.f32 %v218, %v218
    %v283 = vmul.f32 %v219, %v219
    %v284 = vmul.f32 %v220, %v220
    %v285 = vmul.f32 %v221, %v221
    %v286 = vmul.f32 %v222, %v222
    %v287 = vmul.f32 %v223, %v223
    %v288 = vmul.f32 %v224, %v224
    %v289 = vmul.f32 %v225, %v225
    %v290 = vmul.f32 %v226, %v226
    %v291 = vmul.f32 %v227, %v227
    %v292 = vmul.f32 %v228, %v228
    %v293 = vmul.f32 %v229, %v229
    %v294 = vmul.f32 %v230, %v230
    %v295 = vmul.f32 %v231, %v231
    %v296 = vmul.f32 %v232, %v232
    %v297 = vmul.f32 %v233, %v233
    %v298 = vmul.f32 %v234, %v234
    %v299 = vmul.f32 %v235, %v235
    %v300 = vmul.f32 %v236, %v236
    %v301 = vmul.f32 %v237, %v237
    %v302 = vmul.f32 %v238, %v238
    %303 = vadd.xlane.f32.xlu0 %v239
    %v304 = vpop.xlane.xlu0 %303
    %305 = vadd.xlane.f32.xlu0 %v240
    %v306 = vpop.xlane.xlu0 %305
    %307 = vadd.xlane.f32.xlu0 %v241
    %v308 = vpop.xlane.xlu0 %307
    %309 = vadd.xlane.f32.xlu0 %v242
    %v310 = vpop.xlane.xlu0 %309
    %311 = vadd.xlane.f32.xlu0 %v243
    %v312 = vpop.xlane.xlu0 %311
    %313 = vadd.xlane.f32.xlu0 %v244
    %v314 = vpop.xlane.xlu0 %313
    %315 = vadd.xlane.f32.xlu0 %v245
    %v316 = vpop.xlane.xlu0 %315
    %317 = vadd.xlane.f32.xlu0 %v246
    %v318 = vpop.xlane.xlu0 %317
    %319 = vadd.xlane.f32.xlu0 %v247
    %v320 = vpop.xlane.xlu0 %319
    %321 = vadd.xlane.f32.xlu0 %v248
    %v322 = vpop.xlane.xlu0 %321
    %323 = vadd.xlane.f32.xlu0 %v249
    %v324 = vpop.xlane.xlu0 %323
    %325 = vadd.xlane.f32.xlu0 %v250
    %v326 = vpop.xlane.xlu0 %325
    %327 = vadd.xlane.f32.xlu0 %v251
    %v328 = vpop.xlane.xlu0 %327
    %329 = vadd.xlane.f32.xlu0 %v252
    %v330 = vpop.xlane.xlu0 %329
    %331 = vadd.xlane.f32.xlu0 %v253
    %v332 = vpop.xlane.xlu0 %331
    %333 = vadd.xlane.f32.xlu0 %v254
    %v334 = vpop.xlane.xlu0 %333
    %335 = vadd.xlane.f32.xlu0 %v255
    %v336 = vpop.xlane.xlu0 %335
    %337 = vadd.xlane.f32.xlu0 %v256
    %v338 = vpop.xlane.xlu0 %337
    %339 = vadd.xlane.f32.xlu0 %v257
    %v340 = vpop.xlane.xlu0 %339
    %341 = vadd.xlane.f32.xlu0 %v258
    %v342 = vpop.xlane.xlu0 %341
    %343 = vadd.xlane.f32.xlu0 %v259
    %v344 = vpop.xlane.xlu0 %343
    %345 = vadd.xlane.f32.xlu0 %v260
    %v346 = vpop.xlane.xlu0 %345
    %347 = vadd.xlane.f32.xlu0 %v261
    %v348 = vpop.xlane.xlu0 %347
    %349 = vadd.xlane.f32.xlu0 %v262
    %v350 = vpop.xlane.xlu0 %349
    %351 = vadd.xlane.f32.xlu0 %v263
    %v352 = vpop.xlane.xlu0 %351
    %353 = vadd.xlane.f32.xlu0 %v264
    %v354 = vpop.xlane.xlu0 %353
    %355 = vadd.xlane.f32.xlu0 %v265
    %v356 = vpop.xlane.xlu0 %355
    %357 = vadd.xlane.f32.xlu0 %v266
    %v358 = vpop.xlane.xlu0 %357
    %359 = vadd.xlane.f32.xlu0 %v267
    %v360 = vpop.xlane.xlu0 %359
    %361 = vadd.xlane.f32.xlu0 %v268
    %v362 = vpop.xlane.xlu0 %361
    %363 = vadd.xlane.f32.xlu0 %v269
    %v364 = vpop.xlane.xlu0 %363
    %365 = vadd.xlane.f32.xlu0 %v270
    %v366 = vpop.xlane.xlu0 %365
    %367 = vadd.xlane.f32.xlu0 %v271
    %v368 = vpop.xlane.xlu0 %367
    %369 = vadd.xlane.f32.xlu0 %v272
    %v370 = vpop.xlane.xlu0 %369
    %371 = vadd.xlane.f32.xlu0 %v273
    %v372 = vpop.xlane.xlu0 %371
    %373 = vadd.xlane.f32.xlu0 %v274
    %v374 = vpop.xlane.xlu0 %373
    %375 = vadd.xlane.f32.xlu0 %v275
    %v376 = vpop.xlane.xlu0 %375
    %377 = vadd.xlane.f32.xlu0 %v276
    %v378 = vpop.xlane.xlu0 %377
    %379 = vadd.xlane.f32.xlu0 %v277
    %v380 = vpop.xlane.xlu0 %379
    %381 = vadd.xlane.f32.xlu0 %v278
    %v382 = vpop.xlane.xlu0 %381
    %383 = vadd.xlane.f32.xlu0 %v279
    %v384 = vpop.xlane.xlu0 %383
    %385 = vadd.xlane.f32.xlu0 %v280
    %v386 = vpop.xlane.xlu0 %385
    %387 = vadd.xlane.f32.xlu0 %v281
    %v388 = vpop.xlane.xlu0 %387
    %389 = vadd.xlane.f32.xlu0 %v282
    %v390 = vpop.xlane.xlu0 %389
    %391 = vadd.xlane.f32.xlu0 %v283
    %v392 = vpop.xlane.xlu0 %391
    %393 = vadd.xlane.f32.xlu0 %v284
    %v394 = vpop.xlane.xlu0 %393
    %395 = vadd.xlane.f32.xlu0 %v285
    %v396 = vpop.xlane.xlu0 %395
    %397 = vadd.xlane.f32.xlu0 %v286
    %v398 = vpop.xlane.xlu0 %397
    %399 = vadd.xlane.f32.xlu0 %v287
    %v400 = vpop.xlane.xlu0 %399
    %401 = vadd.xlane.f32.xlu0 %v288
    %v402 = vpop.xlane.xlu0 %401
    %403 = vadd.xlane.f32.xlu0 %v289
    %v404 = vpop.xlane.xlu0 %403
    %405 = vadd.xlane.f32.xlu0 %v290
    %v406 = vpop.xlane.xlu0 %405
    %407 = vadd.xlane.f32.xlu0 %v291
    %v408 = vpop.xlane.xlu0 %407
    %409 = vadd.xlane.f32.xlu0 %v292
    %v410 = vpop.xlane.xlu0 %409
    %411 = vadd.xlane.f32.xlu0 %v293
    %v412 = vpop.xlane.xlu0 %411
    %413 = vadd.xlane.f32.xlu0 %v294
    %v414 = vpop.xlane.xlu0 %413
    %415 = vadd.xlane.f32.xlu0 %v295
    %v416 = vpop.xlane.xlu0 %415
    %417 = vadd.xlane.f32.xlu0 %v296
    %v418 = vpop.xlane.xlu0 %417
    %419 = vadd.xlane.f32.xlu0 %v297
    %v420 = vpop.xlane.xlu0 %419
    %421 = vadd.xlane.f32.xlu0 %v298
    %v422 = vpop.xlane.xlu0 %421
    %423 = vadd.xlane.f32.xlu0 %v299
    %v424 = vpop.xlane.xlu0 %423
    %425 = vadd.xlane.f32.xlu0 %v300
    %v426 = vpop.xlane.xlu0 %425
    %427 = vadd.xlane.f32.xlu0 %v301
    %v428 = vpop.xlane.xlu0 %427
    %429 = vadd.xlane.f32.xlu0 %v302
    %v430 = vpop.xlane.xlu0 %429
    %v431 = vld [vmem:[%s2] sm:$0xf]
    %v432 = vld [vmem:[%s2 + $0x4] sm:$0xf]
    %v433 = vld [vmem:[%s2 + $0x8] sm:$0xf]
    %v434 = vld [vmem:[%s2 + $0xc] sm:$0xf]
    %v435 = vld [vmem:[%s2 + $0x10] sm:$0xf]
    %v436 = vld [vmem:[%s2 + $0x14] sm:$0xf]
    %v437 = vld [vmem:[%s2 + $0x18] sm:$0xf]
    %v438 = vld [vmem:[%s2 + $0x1c] sm:$0xf]
    %v439 = vld [vmem:[%s2 + $0x20] sm:$0xf]
    %v440 = vld [vmem:[%s2 + $0x24] sm:$0xf]
    %v441 = vld [vmem:[%s2 + $0x28] sm:$0xf]
    %v442 = vld [vmem:[%s2 + $0x2c] sm:$0xf]
    %v443 = vld [vmem:[%s2 + $0x30] sm:$0xf]
    %v444 = vld [vmem:[%s2 + $0x34] sm:$0xf]
    %v445 = vld [vmem:[%s2 + $0x38] sm:$0xf]
    %v446 = vld [vmem:[%s2 + $0x3c] sm:$0xf]
    %v447 = vld [vmem:[%s2 + $0x40] sm:$0xf]
    %v448 = vld [vmem:[%s2 + $0x44] sm:$0xf]
    %v449 = vld [vmem:[%s2 + $0x48] sm:$0xf]
    %v450 = vld [vmem:[%s2 + $0x4c] sm:$0xf]
    %v451 = vld [vmem:[%s2 + $0x50] sm:$0xf]
    %v452 = vld [vmem:[%s2 + $0x54] sm:$0xf]
    %v453 = vld [vmem:[%s2 + $0x58] sm:$0xf]
    %v454 = vld [vmem:[%s2 + $0x5c] sm:$0xf]
    %v455 = vld [vmem:[%s2 + $0x60] sm:$0xf]
    %v456 = vld [vmem:[%s2 + $0x64] sm:$0xf]
    %v457 = vld [vmem:[%s2 + $0x68] sm:$0xf]
    %v458 = vld [vmem:[%s2 + $0x6c] sm:$0xf]
    %v459 = vld [vmem:[%s2 + $0x70] sm:$0xf]
    %v460 = vld [vmem:[%s2 + $0x74] sm:$0xf]
    %v461 = vld [vmem:[%s2 + $0x78] sm:$0xf]
    %v462 = vld [vmem:[%s2 + $0x7c] sm:$0xf]
    %v463 = vld [vmem:[%s2 + $0x80] sm:$0xf]
    %v464 = vld [vmem:[%s2 + $0x84] sm:$0xf]
    %v465 = vld [vmem:[%s2 + $0x88] sm:$0xf]
    %v466 = vld [vmem:[%s2 + $0x8c] sm:$0xf]
    %v467 = vld [vmem:[%s2 + $0x90] sm:$0xf]
    %v468 = vld [vmem:[%s2 + $0x94] sm:$0xf]
    %v469 = vld [vmem:[%s2 + $0x98] sm:$0xf]
    %v470 = vld [vmem:[%s2 + $0x9c] sm:$0xf]
    %v471 = vld [vmem:[%s2 + $0xa0] sm:$0xf]
    %v472 = vld [vmem:[%s2 + $0xa4] sm:$0xf]
    %v473 = vld [vmem:[%s2 + $0xa8] sm:$0xf]
    %v474 = vld [vmem:[%s2 + $0xac] sm:$0xf]
    %v475 = vld [vmem:[%s2 + $0xb0] sm:$0xf]
    %v476 = vld [vmem:[%s2 + $0xb4] sm:$0xf]
    %v477 = vld [vmem:[%s2 + $0xb8] sm:$0xf]
    %v478 = vld [vmem:[%s2 + $0xbc] sm:$0xf]
    %v479 = vld [vmem:[%s2 + $0xc0] sm:$0xf]
    %v480 = vld [vmem:[%s2 + $0xc4] sm:$0xf]
    %v481 = vld [vmem:[%s2 + $0xc8] sm:$0xf]
    %v482 = vld [vmem:[%s2 + $0xcc] sm:$0xf]
    %v483 = vld [vmem:[%s2 + $0xd0] sm:$0xf]
    %v484 = vld [vmem:[%s2 + $0xd4] sm:$0xf]
    %v485 = vld [vmem:[%s2 + $0xd8] sm:$0xf]
    %v486 = vld [vmem:[%s2 + $0xdc] sm:$0xf]
    %v487 = vld [vmem:[%s2 + $0xe0] sm:$0xf]
    %v488 = vld [vmem:[%s2 + $0xe4] sm:$0xf]
    %v489 = vld [vmem:[%s2 + $0xe8] sm:$0xf]
    %v490 = vld [vmem:[%s2 + $0xec] sm:$0xf]
    %v491 = vld [vmem:[%s2 + $0xf0] sm:$0xf]
    %v492 = vld [vmem:[%s2 + $0xf4] sm:$0xf]
    %v493 = vld [vmem:[%s2 + $0xf8] sm:$0xf]
    %v494 = vld [vmem:[%s2 + $0xfc] sm:$0xf]
    %v495 = vunpack.c.l.bf16 %v431
    %v496 = vunpack.c.l.bf16 %v432
    %v497 = vunpack.c.l.bf16 %v433
    %v498 = vunpack.c.l.bf16 %v434
    %v499 = vunpack.c.l.bf16 %v435
    %v500 = vunpack.c.l.bf16 %v436
    %v501 = vunpack.c.l.bf16 %v437
    %v502 = vunpack.c.l.bf16 %v438
    %v503 = vunpack.c.l.bf16 %v439
    %v504 = vunpack.c.l.bf16 %v440
    %v505 = vunpack.c.l.bf16 %v441
    %v506 = vunpack.c.l.bf16 %v442
    %v507 = vunpack.c.l.bf16 %v443
    %v508 = vunpack.c.l.bf16 %v444
    %v509 = vunpack.c.l.bf16 %v445
    %v510 = vunpack.c.l.bf16 %v446
    %v511 = vunpack.c.l.bf16 %v447
    %v512 = vunpack.c.l.bf16 %v448
    %v513 = vunpack.c.l.bf16 %v449
    %v514 = vunpack.c.l.bf16 %v450
    %v515 = vunpack.c.l.bf16 %v451
    %v516 = vunpack.c.l.bf16 %v452
    %v517 = vunpack.c.l.bf16 %v453
    %v518 = vunpack.c.l.bf16 %v454
    %v519 = vunpack.c.l.bf16 %v455
    %v520 = vunpack.c.l.bf16 %v456
    %v521 = vunpack.c.l.bf16 %v457
    %v522 = vunpack.c.l.bf16 %v458
    %v523 = vunpack.c.l.bf16 %v459
    %v524 = vunpack.c.l.bf16 %v460
    %v525 = vunpack.c.l.bf16 %v461
    %v526 = vunpack.c.l.bf16 %v462
    %v527 = vunpack.c.l.bf16 %v463
    %v528 = vunpack.c.l.bf16 %v464
    %v529 = vunpack.c.l.bf16 %v465
    %v530 = vunpack.c.l.bf16 %v466
    %v531 = vunpack.c.l.bf16 %v467
    %v532 = vunpack.c.l.bf16 %v468
    %v533 = vunpack.c.l.bf16 %v469
    %v534 = vunpack.c.l.bf16 %v470
    %v535 = vunpack.c.l.bf16 %v471
    %v536 = vunpack.c.l.bf16 %v472
    %v537 = vunpack.c.l.bf16 %v473
    %v538 = vunpack.c.l.bf16 %v474
    %v539 = vunpack.c.l.bf16 %v475
    %v540 = vunpack.c.l.bf16 %v476
    %v541 = vunpack.c.l.bf16 %v477
    %v542 = vunpack.c.l.bf16 %v478
    %v543 = vunpack.c.l.bf16 %v479
    %v544 = vunpack.c.l.bf16 %v480
    %v545 = vunpack.c.l.bf16 %v481
    %v546 = vunpack.c.l.bf16 %v482
    %v547 = vunpack.c.l.bf16 %v483
    %v548 = vunpack.c.l.bf16 %v484
    %v549 = vunpack.c.l.bf16 %v485
    %v550 = vunpack.c.l.bf16 %v486
    %v551 = vunpack.c.l.bf16 %v487
    %v552 = vunpack.c.l.bf16 %v488
    %v553 = vunpack.c.l.bf16 %v489
    %v554 = vunpack.c.l.bf16 %v490
    %v555 = vunpack.c.l.bf16 %v491
    %v556 = vunpack.c.l.bf16 %v492
    %v557 = vunpack.c.l.bf16 %v493
    %v558 = vunpack.c.l.bf16 %v494
    %v559 = vrsqrt.pop %v304
    %v560 = vmul.f32 %v304, %v559
    %vm561 = vcmp.eq.f32.partialorder %v304, inf
    %v562 = vsel %vm561, %v304, %v560
    %vm563 = vcmp.eq.f32.partialorder %v304, 0.0
    %v564 = vand.u32 %v304, 2147483648
    %v565 = vsel %vm563, %v564, %v562
    %v566 = vrsqrt.pop %v306
    %v567 = vmul.f32 %v306, %v566
    %vm568 = vcmp.eq.f32.partialorder %v306, inf
    %v569 = vsel %vm568, %v306, %v567
    %vm570 = vcmp.eq.f32.partialorder %v306, 0.0
    %v571 = vand.u32 %v306, 2147483648
    %v572 = vsel %vm570, %v571, %v569
    %v573 = vrsqrt.pop %v308
    %v574 = vmul.f32 %v308, %v573
    %vm575 = vcmp.eq.f32.partialorder %v308, inf
    %v576 = vsel %vm575, %v308, %v574
    %vm577 = vcmp.eq.f32.partialorder %v308, 0.0
    %v578 = vand.u32 %v308, 2147483648
    %v579 = vsel %vm577, %v578, %v576
    %v580 = vrsqrt.pop %v310
    %v581 = vmul.f32 %v310, %v580
    %vm582 = vcmp.eq.f32.partialorder %v310, inf
    %v583 = vsel %vm582, %v310, %v581
    %vm584 = vcmp.eq.f32.partialorder %v310, 0.0
    %v585 = vand.u32 %v310, 2147483648
    %v586 = vsel %vm584, %v585, %v583
    %v587 = vrsqrt.pop %v312
    %v588 = vmul.f32 %v312, %v587
    %vm589 = vcmp.eq.f32.partialorder %v312, inf
    %v590 = vsel %vm589, %v312, %v588
    %vm591 = vcmp.eq.f32.partialorder %v312, 0.0
    %v592 = vand.u32 %v312, 2147483648
    %v593 = vsel %vm591, %v592, %v590
    %v594 = vrsqrt.pop %v314
    %v595 = vmul.f32 %v314, %v594
    %vm596 = vcmp.eq.f32.partialorder %v314, inf
    %v597 = vsel %vm596, %v314, %v595
    %vm598 = vcmp.eq.f32.partialorder %v314, 0.0
    %v599 = vand.u32 %v314, 2147483648
    %v600 = vsel %vm598, %v599, %v597
    %v601 = vrsqrt.pop %v316
    %v602 = vmul.f32 %v316, %v601
    %vm603 = vcmp.eq.f32.partialorder %v316, inf
    %v604 = vsel %vm603, %v316, %v602
    %vm605 = vcmp.eq.f32.partialorder %v316, 0.0
    %v606 = vand.u32 %v316, 2147483648
    %v607 = vsel %vm605, %v606, %v604
    %v608 = vrsqrt.pop %v318
    %v609 = vmul.f32 %v318, %v608
    %vm610 = vcmp.eq.f32.partialorder %v318, inf
    %v611 = vsel %vm610, %v318, %v609
    %vm612 = vcmp.eq.f32.partialorder %v318, 0.0
    %v613 = vand.u32 %v318, 2147483648
    %v614 = vsel %vm612, %v613, %v611
    %v615 = vrsqrt.pop %v320
    %v616 = vmul.f32 %v320, %v615
    %vm617 = vcmp.eq.f32.partialorder %v320, inf
    %v618 = vsel %vm617, %v320, %v616
    %vm619 = vcmp.eq.f32.partialorder %v320, 0.0
    %v620 = vand.u32 %v320, 2147483648
    %v621 = vsel %vm619, %v620, %v618
    %v622 = vrsqrt.pop %v322
    %v623 = vmul.f32 %v322, %v622
    %vm624 = vcmp.eq.f32.partialorder %v322, inf
    %v625 = vsel %vm624, %v322, %v623
    %vm626 = vcmp.eq.f32.partialorder %v322, 0.0
    %v627 = vand.u32 %v322, 2147483648
    %v628 = vsel %vm626, %v627, %v625
    %v629 = vrsqrt.pop %v324
    %v630 = vmul.f32 %v324, %v629
    %vm631 = vcmp.eq.f32.partialorder %v324, inf
    %v632 = vsel %vm631, %v324, %v630
    %vm633 = vcmp.eq.f32.partialorder %v324, 0.0
    %v634 = vand.u32 %v324, 2147483648
    %v635 = vsel %vm633, %v634, %v632
    %v636 = vrsqrt.pop %v326
    %v637 = vmul.f32 %v326, %v636
    %vm638 = vcmp.eq.f32.partialorder %v326, inf
    %v639 = vsel %vm638, %v326, %v637
    %vm640 = vcmp.eq.f32.partialorder %v326, 0.0
    %v641 = vand.u32 %v326, 2147483648
    %v642 = vsel %vm640, %v641, %v639
    %v643 = vrsqrt.pop %v328
    %v644 = vmul.f32 %v328, %v643
    %vm645 = vcmp.eq.f32.partialorder %v328, inf
    %v646 = vsel %vm645, %v328, %v644
    %vm647 = vcmp.eq.f32.partialorder %v328, 0.0
    %v648 = vand.u32 %v328, 2147483648
    %v649 = vsel %vm647, %v648, %v646
    %v650 = vrsqrt.pop %v330
    %v651 = vmul.f32 %v330, %v650
    %vm652 = vcmp.eq.f32.partialorder %v330, inf
    %v653 = vsel %vm652, %v330, %v651
    %vm654 = vcmp.eq.f32.partialorder %v330, 0.0
    %v655 = vand.u32 %v330, 2147483648
    %v656 = vsel %vm654, %v655, %v653
    %v657 = vrsqrt.pop %v332
    %v658 = vmul.f32 %v332, %v657
    %vm659 = vcmp.eq.f32.partialorder %v332, inf
    %v660 = vsel %vm659, %v332, %v658
    %vm661 = vcmp.eq.f32.partialorder %v332, 0.0
    %v662 = vand.u32 %v332, 2147483648
    %v663 = vsel %vm661, %v662, %v660
    %v664 = vrsqrt.pop %v334
    %v665 = vmul.f32 %v334, %v664
    %vm666 = vcmp.eq.f32.partialorder %v334, inf
    %v667 = vsel %vm666, %v334, %v665
    %vm668 = vcmp.eq.f32.partialorder %v334, 0.0
    %v669 = vand.u32 %v334, 2147483648
    %v670 = vsel %vm668, %v669, %v667
    %v671 = vrsqrt.pop %v336
    %v672 = vmul.f32 %v336, %v671
    %vm673 = vcmp.eq.f32.partialorder %v336, inf
    %v674 = vsel %vm673, %v336, %v672
    %vm675 = vcmp.eq.f32.partialorder %v336, 0.0
    %v676 = vand.u32 %v336, 2147483648
    %v677 = vsel %vm675, %v676, %v674
    %v678 = vrsqrt.pop %v338
    %v679 = vmul.f32 %v338, %v678
    %vm680 = vcmp.eq.f32.partialorder %v338, inf
    %v681 = vsel %vm680, %v338, %v679
    %vm682 = vcmp.eq.f32.partialorder %v338, 0.0
    %v683 = vand.u32 %v338, 2147483648
    %v684 = vsel %vm682, %v683, %v681
    %v685 = vrsqrt.pop %v340
    %v686 = vmul.f32 %v340, %v685
    %vm687 = vcmp.eq.f32.partialorder %v340, inf
    %v688 = vsel %vm687, %v340, %v686
    %vm689 = vcmp.eq.f32.partialorder %v340, 0.0
    %v690 = vand.u32 %v340, 2147483648
    %v691 = vsel %vm689, %v690, %v688
    %v692 = vrsqrt.pop %v342
    %v693 = vmul.f32 %v342, %v692
    %vm694 = vcmp.eq.f32.partialorder %v342, inf
    %v695 = vsel %vm694, %v342, %v693
    %vm696 = vcmp.eq.f32.partialorder %v342, 0.0
    %v697 = vand.u32 %v342, 2147483648
    %v698 = vsel %vm696, %v697, %v695
    %v699 = vrsqrt.pop %v344
    %v700 = vmul.f32 %v344, %v699
    %vm701 = vcmp.eq.f32.partialorder %v344, inf
    %v702 = vsel %vm701, %v344, %v700
    %vm703 = vcmp.eq.f32.partialorder %v344, 0.0
    %v704 = vand.u32 %v344, 2147483648
    %v705 = vsel %vm703, %v704, %v702
    %v706 = vrsqrt.pop %v346
    %v707 = vmul.f32 %v346, %v706
    %vm708 = vcmp.eq.f32.partialorder %v346, inf
    %v709 = vsel %vm708, %v346, %v707
    %vm710 = vcmp.eq.f32.partialorder %v346, 0.0
    %v711 = vand.u32 %v346, 2147483648
    %v712 = vsel %vm710, %v711, %v709
    %v713 = vrsqrt.pop %v348
    %v714 = vmul.f32 %v348, %v713
    %vm715 = vcmp.eq.f32.partialorder %v348, inf
    %v716 = vsel %vm715, %v348, %v714
    %vm717 = vcmp.eq.f32.partialorder %v348, 0.0
    %v718 = vand.u32 %v348, 2147483648
    %v719 = vsel %vm717, %v718, %v716
    %v720 = vrsqrt.pop %v350
    %v721 = vmul.f32 %v350, %v720
    %vm722 = vcmp.eq.f32.partialorder %v350, inf
    %v723 = vsel %vm722, %v350, %v721
    %vm724 = vcmp.eq.f32.partialorder %v350, 0.0
    %v725 = vand.u32 %v350, 2147483648
    %v726 = vsel %vm724, %v725, %v723
    %v727 = vrsqrt.pop %v352
    %v728 = vmul.f32 %v352, %v727
    %vm729 = vcmp.eq.f32.partialorder %v352, inf
    %v730 = vsel %vm729, %v352, %v728
    %vm731 = vcmp.eq.f32.partialorder %v352, 0.0
    %v732 = vand.u32 %v352, 2147483648
    %v733 = vsel %vm731, %v732, %v730
    %v734 = vrsqrt.pop %v354
    %v735 = vmul.f32 %v354, %v734
    %vm736 = vcmp.eq.f32.partialorder %v354, inf
    %v737 = vsel %vm736, %v354, %v735
    %vm738 = vcmp.eq.f32.partialorder %v354, 0.0
    %v739 = vand.u32 %v354, 2147483648
    %v740 = vsel %vm738, %v739, %v737
    %v741 = vrsqrt.pop %v356
    %v742 = vmul.f32 %v356, %v741
    %vm743 = vcmp.eq.f32.partialorder %v356, inf
    %v744 = vsel %vm743, %v356, %v742
    %vm745 = vcmp.eq.f32.partialorder %v356, 0.0
    %v746 = vand.u32 %v356, 2147483648
    %v747 = vsel %vm745, %v746, %v744
    %v748 = vrsqrt.pop %v358
    %v749 = vmul.f32 %v358, %v748
    %vm750 = vcmp.eq.f32.partialorder %v358, inf
    %v751 = vsel %vm750, %v358, %v749
    %vm752 = vcmp.eq.f32.partialorder %v358, 0.0
    %v753 = vand.u32 %v358, 2147483648
    %v754 = vsel %vm752, %v753, %v751
    %v755 = vrsqrt.pop %v360
    %v756 = vmul.f32 %v360, %v755
    %vm757 = vcmp.eq.f32.partialorder %v360, inf
    %v758 = vsel %vm757, %v360, %v756
    %vm759 = vcmp.eq.f32.partialorder %v360, 0.0
    %v760 = vand.u32 %v360, 2147483648
    %v761 = vsel %vm759, %v760, %v758
    %v762 = vrsqrt.pop %v362
    %v763 = vmul.f32 %v362, %v762
    %vm764 = vcmp.eq.f32.partialorder %v362, inf
    %v765 = vsel %vm764, %v362, %v763
    %vm766 = vcmp.eq.f32.partialorder %v362, 0.0
    %v767 = vand.u32 %v362, 2147483648
    %v768 = vsel %vm766, %v767, %v765
    %v769 = vrsqrt.pop %v364
    %v770 = vmul.f32 %v364, %v769
    %vm771 = vcmp.eq.f32.partialorder %v364, inf
    %v772 = vsel %vm771, %v364, %v770
    %vm773 = vcmp.eq.f32.partialorder %v364, 0.0
    %v774 = vand.u32 %v364, 2147483648
    %v775 = vsel %vm773, %v774, %v772
    %v776 = vrsqrt.pop %v366
    %v777 = vmul.f32 %v366, %v776
    %vm778 = vcmp.eq.f32.partialorder %v366, inf
    %v779 = vsel %vm778, %v366, %v777
    %vm780 = vcmp.eq.f32.partialorder %v366, 0.0
    %v781 = vand.u32 %v366, 2147483648
    %v782 = vsel %vm780, %v781, %v779
    %v783 = vrsqrt.pop %v368
    %v784 = vmul.f32 %v368, %v783
    %vm785 = vcmp.eq.f32.partialorder %v368, inf
    %v786 = vsel %vm785, %v368, %v784
    %vm787 = vcmp.eq.f32.partialorder %v368, 0.0
    %v788 = vand.u32 %v368, 2147483648
    %v789 = vsel %vm787, %v788, %v786
    %v790 = vrsqrt.pop %v370
    %v791 = vmul.f32 %v370, %v790
    %vm792 = vcmp.eq.f32.partialorder %v370, inf
    %v793 = vsel %vm792, %v370, %v791
    %vm794 = vcmp.eq.f32.partialorder %v370, 0.0
    %v795 = vand.u32 %v370, 2147483648
    %v796 = vsel %vm794, %v795, %v793
    %v797 = vrsqrt.pop %v372
    %v798 = vmul.f32 %v372, %v797
    %vm799 = vcmp.eq.f32.partialorder %v372, inf
    %v800 = vsel %vm799, %v372, %v798
    %vm801 = vcmp.eq.f32.partialorder %v372, 0.0
    %v802 = vand.u32 %v372, 2147483648
    %v803 = vsel %vm801, %v802, %v800
    %v804 = vrsqrt.pop %v374
    %v805 = vmul.f32 %v374, %v804
    %vm806 = vcmp.eq.f32.partialorder %v374, inf
    %v807 = vsel %vm806, %v374, %v805
    %vm808 = vcmp.eq.f32.partialorder %v374, 0.0
    %v809 = vand.u32 %v374, 2147483648
    %v810 = vsel %vm808, %v809, %v807
    %v811 = vrsqrt.pop %v376
    %v812 = vmul.f32 %v376, %v811
    %vm813 = vcmp.eq.f32.partialorder %v376, inf
    %v814 = vsel %vm813, %v376, %v812
    %vm815 = vcmp.eq.f32.partialorder %v376, 0.0
    %v816 = vand.u32 %v376, 2147483648
    %v817 = vsel %vm815, %v816, %v814
    %v818 = vrsqrt.pop %v378
    %v819 = vmul.f32 %v378, %v818
    %vm820 = vcmp.eq.f32.partialorder %v378, inf
    %v821 = vsel %vm820, %v378, %v819
    %vm822 = vcmp.eq.f32.partialorder %v378, 0.0
    %v823 = vand.u32 %v378, 2147483648
    %v824 = vsel %vm822, %v823, %v821
    %v825 = vrsqrt.pop %v380
    %v826 = vmul.f32 %v380, %v825
    %vm827 = vcmp.eq.f32.partialorder %v380, inf
    %v828 = vsel %vm827, %v380, %v826
    %vm829 = vcmp.eq.f32.partialorder %v380, 0.0
    %v830 = vand.u32 %v380, 2147483648
    %v831 = vsel %vm829, %v830, %v828
    %v832 = vrsqrt.pop %v382
    %v833 = vmul.f32 %v382, %v832
    %vm834 = vcmp.eq.f32.partialorder %v382, inf
    %v835 = vsel %vm834, %v382, %v833
    %vm836 = vcmp.eq.f32.partialorder %v382, 0.0
    %v837 = vand.u32 %v382, 2147483648
    %v838 = vsel %vm836, %v837, %v835
    %v839 = vrsqrt.pop %v384
    %v840 = vmul.f32 %v384, %v839
    %vm841 = vcmp.eq.f32.partialorder %v384, inf
    %v842 = vsel %vm841, %v384, %v840
    %vm843 = vcmp.eq.f32.partialorder %v384, 0.0
    %v844 = vand.u32 %v384, 2147483648
    %v845 = vsel %vm843, %v844, %v842
    %v846 = vrsqrt.pop %v386
    %v847 = vmul.f32 %v386, %v846
    %vm848 = vcmp.eq.f32.partialorder %v386, inf
    %v849 = vsel %vm848, %v386, %v847
    %vm850 = vcmp.eq.f32.partialorder %v386, 0.0
    %v851 = vand.u32 %v386, 2147483648
    %v852 = vsel %vm850, %v851, %v849
    %v853 = vrsqrt.pop %v388
    %v854 = vmul.f32 %v388, %v853
    %vm855 = vcmp.eq.f32.partialorder %v388, inf
    %v856 = vsel %vm855, %v388, %v854
    %vm857 = vcmp.eq.f32.partialorder %v388, 0.0
    %v858 = vand.u32 %v388, 2147483648
    %v859 = vsel %vm857, %v858, %v856
    %v860 = vrsqrt.pop %v390
    %v861 = vmul.f32 %v390, %v860
    %vm862 = vcmp.eq.f32.partialorder %v390, inf
    %v863 = vsel %vm862, %v390, %v861
    %vm864 = vcmp.eq.f32.partialorder %v390, 0.0
    %v865 = vand.u32 %v390, 2147483648
    %v866 = vsel %vm864, %v865, %v863
    %v867 = vrsqrt.pop %v392
    %v868 = vmul.f32 %v392, %v867
    %vm869 = vcmp.eq.f32.partialorder %v392, inf
    %v870 = vsel %vm869, %v392, %v868
    %vm871 = vcmp.eq.f32.partialorder %v392, 0.0
    %v872 = vand.u32 %v392, 2147483648
    %v873 = vsel %vm871, %v872, %v870
    %v874 = vrsqrt.pop %v394
    %v875 = vmul.f32 %v394, %v874
    %vm876 = vcmp.eq.f32.partialorder %v394, inf
    %v877 = vsel %vm876, %v394, %v875
    %vm878 = vcmp.eq.f32.partialorder %v394, 0.0
    %v879 = vand.u32 %v394, 2147483648
    %v880 = vsel %vm878, %v879, %v877
    %v881 = vrsqrt.pop %v396
    %v882 = vmul.f32 %v396, %v881
    %vm883 = vcmp.eq.f32.partialorder %v396, inf
    %v884 = vsel %vm883, %v396, %v882
    %vm885 = vcmp.eq.f32.partialorder %v396, 0.0
    %v886 = vand.u32 %v396, 2147483648
    %v887 = vsel %vm885, %v886, %v884
    %v888 = vrsqrt.pop %v398
    %v889 = vmul.f32 %v398, %v888
    %vm890 = vcmp.eq.f32.partialorder %v398, inf
    %v891 = vsel %vm890, %v398, %v889
    %vm892 = vcmp.eq.f32.partialorder %v398, 0.0
    %v893 = vand.u32 %v398, 2147483648
    %v894 = vsel %vm892, %v893, %v891
    %v895 = vrsqrt.pop %v400
    %v896 = vmul.f32 %v400, %v895
    %vm897 = vcmp.eq.f32.partialorder %v400, inf
    %v898 = vsel %vm897, %v400, %v896
    %vm899 = vcmp.eq.f32.partialorder %v400, 0.0
    %v900 = vand.u32 %v400, 2147483648
    %v901 = vsel %vm899, %v900, %v898
    %v902 = vrsqrt.pop %v402
    %v903 = vmul.f32 %v402, %v902
    %vm904 = vcmp.eq.f32.partialorder %v402, inf
    %v905 = vsel %vm904, %v402, %v903
    %vm906 = vcmp.eq.f32.partialorder %v402, 0.0
    %v907 = vand.u32 %v402, 2147483648
    %v908 = vsel %vm906, %v907, %v905
    %v909 = vrsqrt.pop %v404
    %v910 = vmul.f32 %v404, %v909
    %vm911 = vcmp.eq.f32.partialorder %v404, inf
    %v912 = vsel %vm911, %v404, %v910
    %vm913 = vcmp.eq.f32.partialorder %v404, 0.0
    %v914 = vand.u32 %v404, 2147483648
    %v915 = vsel %vm913, %v914, %v912
    %v916 = vrsqrt.pop %v406
    %v917 = vmul.f32 %v406, %v916
    %vm918 = vcmp.eq.f32.partialorder %v406, inf
    %v919 = vsel %vm918, %v406, %v917
    %vm920 = vcmp.eq.f32.partialorder %v406, 0.0
    %v921 = vand.u32 %v406, 2147483648
    %v922 = vsel %vm920, %v921, %v919
    %v923 = vrsqrt.pop %v408
    %v924 = vmul.f32 %v408, %v923
    %vm925 = vcmp.eq.f32.partialorder %v408, inf
    %v926 = vsel %vm925, %v408, %v924
    %vm927 = vcmp.eq.f32.partialorder %v408, 0.0
    %v928 = vand.u32 %v408, 2147483648
    %v929 = vsel %vm927, %v928, %v926
    %v930 = vrsqrt.pop %v410
    %v931 = vmul.f32 %v410, %v930
    %vm932 = vcmp.eq.f32.partialorder %v410, inf
    %v933 = vsel %vm932, %v410, %v931
    %vm934 = vcmp.eq.f32.partialorder %v410, 0.0
    %v935 = vand.u32 %v410, 2147483648
    %v936 = vsel %vm934, %v935, %v933
    %v937 = vrsqrt.pop %v412
    %v938 = vmul.f32 %v412, %v937
    %vm939 = vcmp.eq.f32.partialorder %v412, inf
    %v940 = vsel %vm939, %v412, %v938
    %vm941 = vcmp.eq.f32.partialorder %v412, 0.0
    %v942 = vand.u32 %v412, 2147483648
    %v943 = vsel %vm941, %v942, %v940
    %v944 = vrsqrt.pop %v414
    %v945 = vmul.f32 %v414, %v944
    %vm946 = vcmp.eq.f32.partialorder %v414, inf
    %v947 = vsel %vm946, %v414, %v945
    %vm948 = vcmp.eq.f32.partialorder %v414, 0.0
    %v949 = vand.u32 %v414, 2147483648
    %v950 = vsel %vm948, %v949, %v947
    %v951 = vrsqrt.pop %v416
    %v952 = vmul.f32 %v416, %v951
    %vm953 = vcmp.eq.f32.partialorder %v416, inf
    %v954 = vsel %vm953, %v416, %v952
    %vm955 = vcmp.eq.f32.partialorder %v416, 0.0
    %v956 = vand.u32 %v416, 2147483648
    %v957 = vsel %vm955, %v956, %v954
    %v958 = vrsqrt.pop %v418
    %v959 = vmul.f32 %v418, %v958
    %vm960 = vcmp.eq.f32.partialorder %v418, inf
    %v961 = vsel %vm960, %v418, %v959
    %vm962 = vcmp.eq.f32.partialorder %v418, 0.0
    %v963 = vand.u32 %v418, 2147483648
    %v964 = vsel %vm962, %v963, %v961
    %v965 = vrsqrt.pop %v420
    %v966 = vmul.f32 %v420, %v965
    %vm967 = vcmp.eq.f32.partialorder %v420, inf
    %v968 = vsel %vm967, %v420, %v966
    %vm969 = vcmp.eq.f32.partialorder %v420, 0.0
    %v970 = vand.u32 %v420, 2147483648
    %v971 = vsel %vm969, %v970, %v968
    %v972 = vrsqrt.pop %v422
    %v973 = vmul.f32 %v422, %v972
    %vm974 = vcmp.eq.f32.partialorder %v422, inf
    %v975 = vsel %vm974, %v422, %v973
    %vm976 = vcmp.eq.f32.partialorder %v422, 0.0
    %v977 = vand.u32 %v422, 2147483648
    %v978 = vsel %vm976, %v977, %v975
    %v979 = vrsqrt.pop %v424
    %v980 = vmul.f32 %v424, %v979
    %vm981 = vcmp.eq.f32.partialorder %v424, inf
    %v982 = vsel %vm981, %v424, %v980
    %vm983 = vcmp.eq.f32.partialorder %v424, 0.0
    %v984 = vand.u32 %v424, 2147483648
    %v985 = vsel %vm983, %v984, %v982
    %v986 = vrsqrt.pop %v426
    %v987 = vmul.f32 %v426, %v986
    %vm988 = vcmp.eq.f32.partialorder %v426, inf
    %v989 = vsel %vm988, %v426, %v987
    %vm990 = vcmp.eq.f32.partialorder %v426, 0.0
    %v991 = vand.u32 %v426, 2147483648
    %v992 = vsel %vm990, %v991, %v989
    %v993 = vrsqrt.pop %v428
    %v994 = vmul.f32 %v428, %v993
    %vm995 = vcmp.eq.f32.partialorder %v428, inf
    %v996 = vsel %vm995, %v428, %v994
    %vm997 = vcmp.eq.f32.partialorder %v428, 0.0
    %v998 = vand.u32 %v428, 2147483648
    %v999 = vsel %vm997, %v998, %v996
    %v1000 = vrsqrt.pop %v430
    %v1001 = vmul.f32 %v430, %v1000
    %vm1002 = vcmp.eq.f32.partialorder %v430, inf
    %v1003 = vsel %vm1002, %v430, %v1001
    %vm1004 = vcmp.eq.f32.partialorder %v430, 0.0
    %v1005 = vand.u32 %v430, 2147483648
    %v1006 = vsel %vm1004, %v1005, %v1003
    %v1007 = vsub.f32 1.0, %v565
    %v1008 = vsub.f32 1.0, %v572
    %v1009 = vsub.f32 1.0, %v579
    %v1010 = vsub.f32 1.0, %v586
    %v1011 = vsub.f32 1.0, %v593
    %v1012 = vsub.f32 1.0, %v600
    %v1013 = vsub.f32 1.0, %v607
    %v1014 = vsub.f32 1.0, %v614
    %v1015 = vsub.f32 1.0, %v621
    %v1016 = vsub.f32 1.0, %v628
    %v1017 = vsub.f32 1.0, %v635
    %v1018 = vsub.f32 1.0, %v642
    %v1019 = vsub.f32 1.0, %v649
    %v1020 = vsub.f32 1.0, %v656
    %v1021 = vsub.f32 1.0, %v663
    %v1022 = vsub.f32 1.0, %v670
    %v1023 = vsub.f32 1.0, %v677
    %v1024 = vsub.f32 1.0, %v684
    %v1025 = vsub.f32 1.0, %v691
    %v1026 = vsub.f32 1.0, %v698
    %v1027 = vsub.f32 1.0, %v705
    %v1028 = vsub.f32 1.0, %v712
    %v1029 = vsub.f32 1.0, %v719
    %v1030 = vsub.f32 1.0, %v726
    %v1031 = vsub.f32 1.0, %v733
    %v1032 = vsub.f32 1.0, %v740
    %v1033 = vsub.f32 1.0, %v747
    %v1034 = vsub.f32 1.0, %v754
    %v1035 = vsub.f32 1.0, %v761
    %v1036 = vsub.f32 1.0, %v768
    %v1037 = vsub.f32 1.0, %v775
    %v1038 = vsub.f32 1.0, %v782
    %v1039 = vsub.f32 1.0, %v789
    %v1040 = vsub.f32 1.0, %v796
    %v1041 = vsub.f32 1.0, %v803
    %v1042 = vsub.f32 1.0, %v810
    %v1043 = vsub.f32 1.0, %v817
    %v1044 = vsub.f32 1.0, %v824
    %v1045 = vsub.f32 1.0, %v831
    %v1046 = vsub.f32 1.0, %v838
    %v1047 = vsub.f32 1.0, %v845
    %v1048 = vsub.f32 1.0, %v852
    %v1049 = vsub.f32 1.0, %v859
    %v1050 = vsub.f32 1.0, %v866
    %v1051 = vsub.f32 1.0, %v873
    %v1052 = vsub.f32 1.0, %v880
    %v1053 = vsub.f32 1.0, %v887
    %v1054 = vsub.f32 1.0, %v894
    %v1055 = vsub.f32 1.0, %v901
    %v1056 = vsub.f32 1.0, %v908
    %v1057 = vsub.f32 1.0, %v915
    %v1058 = vsub.f32 1.0, %v922
    %v1059 = vsub.f32 1.0, %v929
    %v1060 = vsub.f32 1.0, %v936
    %v1061 = vsub.f32 1.0, %v943
    %v1062 = vsub.f32 1.0, %v950
    %v1063 = vsub.f32 1.0, %v957
    %v1064 = vsub.f32 1.0, %v964
    %v1065 = vsub.f32 1.0, %v971
    %v1066 = vsub.f32 1.0, %v978
    %v1067 = vsub.f32 1.0, %v985
    %v1068 = vsub.f32 1.0, %v992
    %v1069 = vsub.f32 1.0, %v999
    %v1070 = vsub.f32 1.0, %v1006
    %v1071 = vmax.f32 %v1007, 0.0
    %v1072 = vmax.f32 %v1008, 0.0
    %v1073 = vmax.f32 %v1009, 0.0
    %v1074 = vmax.f32 %v1010, 0.0
    %v1075 = vmax.f32 %v1011, 0.0
    %v1076 = vmax.f32 %v1012, 0.0
    %v1077 = vmax.f32 %v1013, 0.0
    %v1078 = vmax.f32 %v1014, 0.0
    %v1079 = vmax.f32 %v1015, 0.0
    %v1080 = vmax.f32 %v1016, 0.0
    %v1081 = vmax.f32 %v1017, 0.0
    %v1082 = vmax.f32 %v1018, 0.0
    %v1083 = vmax.f32 %v1019, 0.0
    %v1084 = vmax.f32 %v1020, 0.0
    %v1085 = vmax.f32 %v1021, 0.0
    %v1086 = vmax.f32 %v1022, 0.0
    %v1087 = vmax.f32 %v1023, 0.0
    %v1088 = vmax.f32 %v1024, 0.0
    %v1089 = vmax.f32 %v1025, 0.0
    %v1090 = vmax.f32 %v1026, 0.0
    %v1091 = vmax.f32 %v1027, 0.0
    %v1092 = vmax.f32 %v1028, 0.0
    %v1093 = vmax.f32 %v1029, 0.0
    %v1094 = vmax.f32 %v1030, 0.0
    %v1095 = vmax.f32 %v1031, 0.0
    %v1096 = vmax.f32 %v1032, 0.0
    %v1097 = vmax.f32 %v1033, 0.0
    %v1098 = vmax.f32 %v1034, 0.0
    %v1099 = vmax.f32 %v1035, 0.0
    %v1100 = vmax.f32 %v1036, 0.0
    %v1101 = vmax.f32 %v1037, 0.0
    %v1102 = vmax.f32 %v1038, 0.0
    %v1103 = vmax.f32 %v1039, 0.0
    %v1104 = vmax.f32 %v1040, 0.0
    %v1105 = vmax.f32 %v1041, 0.0
    %v1106 = vmax.f32 %v1042, 0.0
    %v1107 = vmax.f32 %v1043, 0.0
    %v1108 = vmax.f32 %v1044, 0.0
    %v1109 = vmax.f32 %v1045, 0.0
    %v1110 = vmax.f32 %v1046, 0.0
    %v1111 = vmax.f32 %v1047, 0.0
    %v1112 = vmax.f32 %v1048, 0.0
    %v1113 = vmax.f32 %v1049, 0.0
    %v1114 = vmax.f32 %v1050, 0.0
    %v1115 = vmax.f32 %v1051, 0.0
    %v1116 = vmax.f32 %v1052, 0.0
    %v1117 = vmax.f32 %v1053, 0.0
    %v1118 = vmax.f32 %v1054, 0.0
    %v1119 = vmax.f32 %v1055, 0.0
    %v1120 = vmax.f32 %v1056, 0.0
    %v1121 = vmax.f32 %v1057, 0.0
    %v1122 = vmax.f32 %v1058, 0.0
    %v1123 = vmax.f32 %v1059, 0.0
    %v1124 = vmax.f32 %v1060, 0.0
    %v1125 = vmax.f32 %v1061, 0.0
    %v1126 = vmax.f32 %v1062, 0.0
    %v1127 = vmax.f32 %v1063, 0.0
    %v1128 = vmax.f32 %v1064, 0.0
    %v1129 = vmax.f32 %v1065, 0.0
    %v1130 = vmax.f32 %v1066, 0.0
    %v1131 = vmax.f32 %v1067, 0.0
    %v1132 = vmax.f32 %v1068, 0.0
    %v1133 = vmax.f32 %v1069, 0.0
    %v1134 = vmax.f32 %v1070, 0.0
    %v1135 = vmul.f32 %v495, %v304
    %v1136 = vmul.f32 %v496, %v306
    %v1137 = vmul.f32 %v497, %v308
    %v1138 = vmul.f32 %v498, %v310
    %v1139 = vmul.f32 %v499, %v312
    %v1140 = vmul.f32 %v500, %v314
    %v1141 = vmul.f32 %v501, %v316
    %v1142 = vmul.f32 %v502, %v318
    %v1143 = vmul.f32 %v503, %v320
    %v1144 = vmul.f32 %v504, %v322
    %v1145 = vmul.f32 %v505, %v324
    %v1146 = vmul.f32 %v506, %v326
    %v1147 = vmul.f32 %v507, %v328
    %v1148 = vmul.f32 %v508, %v330
    %v1149 = vmul.f32 %v509, %v332
    %v1150 = vmul.f32 %v510, %v334
    %v1151 = vmul.f32 %v511, %v336
    %v1152 = vmul.f32 %v512, %v338
    %v1153 = vmul.f32 %v513, %v340
    %v1154 = vmul.f32 %v514, %v342
    %v1155 = vmul.f32 %v515, %v344
    %v1156 = vmul.f32 %v516, %v346
    %v1157 = vmul.f32 %v517, %v348
    %v1158 = vmul.f32 %v518, %v350
    %v1159 = vmul.f32 %v519, %v352
    %v1160 = vmul.f32 %v520, %v354
    %v1161 = vmul.f32 %v521, %v356
    %v1162 = vmul.f32 %v522, %v358
    %v1163 = vmul.f32 %v523, %v360
    %v1164 = vmul.f32 %v524, %v362
    %v1165 = vmul.f32 %v525, %v364
    %v1166 = vmul.f32 %v526, %v366
    %v1167 = vmul.f32 %v527, %v368
    %v1168 = vmul.f32 %v528, %v370
    %v1169 = vmul.f32 %v529, %v372
    %v1170 = vmul.f32 %v530, %v374
    %v1171 = vmul.f32 %v531, %v376
    %v1172 = vmul.f32 %v532, %v378
    %v1173 = vmul.f32 %v533, %v380
    %v1174 = vmul.f32 %v534, %v382
    %v1175 = vmul.f32 %v535, %v384
    %v1176 = vmul.f32 %v536, %v386
    %v1177 = vmul.f32 %v537, %v388
    %v1178 = vmul.f32 %v538, %v390
    %v1179 = vmul.f32 %v539, %v392
    %v1180 = vmul.f32 %v540, %v394
    %v1181 = vmul.f32 %v541, %v396
    %v1182 = vmul.f32 %v542, %v398
    %v1183 = vmul.f32 %v543, %v400
    %v1184 = vmul.f32 %v544, %v402
    %v1185 = vmul.f32 %v545, %v404
    %v1186 = vmul.f32 %v546, %v406
    %v1187 = vmul.f32 %v547, %v408
    %v1188 = vmul.f32 %v548, %v410
    %v1189 = vmul.f32 %v549, %v412
    %v1190 = vmul.f32 %v550, %v414
    %v1191 = vmul.f32 %v551, %v416
    %v1192 = vmul.f32 %v552, %v418
    %v1193 = vmul.f32 %v553, %v420
    %v1194 = vmul.f32 %v554, %v422
    %v1195 = vmul.f32 %v555, %v424
    %v1196 = vmul.f32 %v556, %v426
    %v1197 = vmul.f32 %v557, %v428
    %v1198 = vmul.f32 %v558, %v430
    %v1199 = vsub.f32 1.0, %v495
    %v1200 = vsub.f32 1.0, %v496
    %v1201 = vsub.f32 1.0, %v497
    %v1202 = vsub.f32 1.0, %v498
    %v1203 = vsub.f32 1.0, %v499
    %v1204 = vsub.f32 1.0, %v500
    %v1205 = vsub.f32 1.0, %v501
    %v1206 = vsub.f32 1.0, %v502
    %v1207 = vsub.f32 1.0, %v503
    %v1208 = vsub.f32 1.0, %v504
    %v1209 = vsub.f32 1.0, %v505
    %v1210 = vsub.f32 1.0, %v506
    %v1211 = vsub.f32 1.0, %v507
    %v1212 = vsub.f32 1.0, %v508
    %v1213 = vsub.f32 1.0, %v509
    %v1214 = vsub.f32 1.0, %v510
    %v1215 = vsub.f32 1.0, %v511
    %v1216 = vsub.f32 1.0, %v512
    %v1217 = vsub.f32 1.0, %v513
    %v1218 = vsub.f32 1.0, %v514
    %v1219 = vsub.f32 1.0, %v515
    %v1220 = vsub.f32 1.0, %v516
    %v1221 = vsub.f32 1.0, %v517
    %v1222 = vsub.f32 1.0, %v518
    %v1223 = vsub.f32 1.0, %v519
    %v1224 = vsub.f32 1.0, %v520
    %v1225 = vsub.f32 1.0, %v521
    %v1226 = vsub.f32 1.0, %v522
    %v1227 = vsub.f32 1.0, %v523
    %v1228 = vsub.f32 1.0, %v524
    %v1229 = vsub.f32 1.0, %v525
    %v1230 = vsub.f32 1.0, %v526
    %v1231 = vsub.f32 1.0, %v527
    %v1232 = vsub.f32 1.0, %v528
    %v1233 = vsub.f32 1.0, %v529
    %v1234 = vsub.f32 1.0, %v530
    %v1235 = vsub.f32 1.0, %v531
    %v1236 = vsub.f32 1.0, %v532
    %v1237 = vsub.f32 1.0, %v533
    %v1238 = vsub.f32 1.0, %v534
    %v1239 = vsub.f32 1.0, %v535
    %v1240 = vsub.f32 1.0, %v536
    %v1241 = vsub.f32 1.0, %v537
    %v1242 = vsub.f32 1.0, %v538
    %v1243 = vsub.f32 1.0, %v539
    %v1244 = vsub.f32 1.0, %v540
    %v1245 = vsub.f32 1.0, %v541
    %v1246 = vsub.f32 1.0, %v542
    %v1247 = vsub.f32 1.0, %v543
    %v1248 = vsub.f32 1.0, %v544
    %v1249 = vsub.f32 1.0, %v545
    %v1250 = vsub.f32 1.0, %v546
    %v1251 = vsub.f32 1.0, %v547
    %v1252 = vsub.f32 1.0, %v548
    %v1253 = vsub.f32 1.0, %v549
    %v1254 = vsub.f32 1.0, %v550
    %v1255 = vsub.f32 1.0, %v551
    %v1256 = vsub.f32 1.0, %v552
    %v1257 = vsub.f32 1.0, %v553
    %v1258 = vsub.f32 1.0, %v554
    %v1259 = vsub.f32 1.0, %v555
    %v1260 = vsub.f32 1.0, %v556
    %v1261 = vsub.f32 1.0, %v557
    %v1262 = vsub.f32 1.0, %v558
    %v1263 = vmul.f32 %v1199, %v1071
    %v1264 = vmul.f32 %v1200, %v1072
    %v1265 = vmul.f32 %v1201, %v1073
    %v1266 = vmul.f32 %v1202, %v1074
    %v1267 = vmul.f32 %v1203, %v1075
    %v1268 = vmul.f32 %v1204, %v1076
    %v1269 = vmul.f32 %v1205, %v1077
    %v1270 = vmul.f32 %v1206, %v1078
    %v1271 = vmul.f32 %v1207, %v1079
    %v1272 = vmul.f32 %v1208, %v1080
    %v1273 = vmul.f32 %v1209, %v1081
    %v1274 = vmul.f32 %v1210, %v1082
    %v1275 = vmul.f32 %v1211, %v1083
    %v1276 = vmul.f32 %v1212, %v1084
    %v1277 = vmul.f32 %v1213, %v1085
    %v1278 = vmul.f32 %v1214, %v1086
    %v1279 = vmul.f32 %v1215, %v1087
    %v1280 = vmul.f32 %v1216, %v1088
    %v1281 = vmul.f32 %v1217, %v1089
    %v1282 = vmul.f32 %v1218, %v1090
    %v1283 = vmul.f32 %v1219, %v1091
    %v1284 = vmul.f32 %v1220, %v1092
    %v1285 = vmul.f32 %v1221, %v1093
    %v1286 = vmul.f32 %v1222, %v1094
    %v1287 = vmul.f32 %v1223, %v1095
    %v1288 = vmul.f32 %v1224, %v1096
    %v1289 = vmul.f32 %v1225, %v1097
    %v1290 = vmul.f32 %v1226, %v1098
    %v1291 = vmul.f32 %v1227, %v1099
    %v1292 = vmul.f32 %v1228, %v1100
    %v1293 = vmul.f32 %v1229, %v1101
    %v1294 = vmul.f32 %v1230, %v1102
    %v1295 = vmul.f32 %v1231, %v1103
    %v1296 = vmul.f32 %v1232, %v1104
    %v1297 = vmul.f32 %v1233, %v1105
    %v1298 = vmul.f32 %v1234, %v1106
    %v1299 = vmul.f32 %v1235, %v1107
    %v1300 = vmul.f32 %v1236, %v1108
    %v1301 = vmul.f32 %v1237, %v1109
    %v1302 = vmul.f32 %v1238, %v1110
    %v1303 = vmul.f32 %v1239, %v1111
    %v1304 = vmul.f32 %v1240, %v1112
    %v1305 = vmul.f32 %v1241, %v1113
    %v1306 = vmul.f32 %v1242, %v1114
    %v1307 = vmul.f32 %v1243, %v1115
    %v1308 = vmul.f32 %v1244, %v1116
    %v1309 = vmul.f32 %v1245, %v1117
    %v1310 = vmul.f32 %v1246, %v1118
    %v1311 = vmul.f32 %v1247, %v1119
    %v1312 = vmul.f32 %v1248, %v1120
    %v1313 = vmul.f32 %v1249, %v1121
    %v1314 = vmul.f32 %v1250, %v1122
    %v1315 = vmul.f32 %v1251, %v1123
    %v1316 = vmul.f32 %v1252, %v1124
    %v1317 = vmul.f32 %v1253, %v1125
    %v1318 = vmul.f32 %v1254, %v1126
    %v1319 = vmul.f32 %v1255, %v1127
    %v1320 = vmul.f32 %v1256, %v1128
    %v1321 = vmul.f32 %v1257, %v1129
    %v1322 = vmul.f32 %v1258, %v1130
    %v1323 = vmul.f32 %v1259, %v1131
    %v1324 = vmul.f32 %v1260, %v1132
    %v1325 = vmul.f32 %v1261, %v1133
    %v1326 = vmul.f32 %v1262, %v1134
    %v1327 = vmul.f32 %v1263, %v1071
    %v1328 = vmul.f32 %v1264, %v1072
    %v1329 = vmul.f32 %v1265, %v1073
    %v1330 = vmul.f32 %v1266, %v1074
    %v1331 = vmul.f32 %v1267, %v1075
    %v1332 = vmul.f32 %v1268, %v1076
    %v1333 = vmul.f32 %v1269, %v1077
    %v1334 = vmul.f32 %v1270, %v1078
    %v1335 = vmul.f32 %v1271, %v1079
    %v1336 = vmul.f32 %v1272, %v1080
    %v1337 = vmul.f32 %v1273, %v1081
    %v1338 = vmul.f32 %v1274, %v1082
    %v1339 = vmul.f32 %v1275, %v1083
    %v1340 = vmul.f32 %v1276, %v1084
    %v1341 = vmul.f32 %v1277, %v1085
    %v1342 = vmul.f32 %v1278, %v1086
    %v1343 = vmul.f32 %v1279, %v1087
    %v1344 = vmul.f32 %v1280, %v1088
    %v1345 = vmul.f32 %v1281, %v1089
    %v1346 = vmul.f32 %v1282, %v1090
    %v1347 = vmul.f32 %v1283, %v1091
    %v1348 = vmul.f32 %v1284, %v1092
    %v1349 = vmul.f32 %v1285, %v1093
    %v1350 = vmul.f32 %v1286, %v1094
    %v1351 = vmul.f32 %v1287, %v1095
    %v1352 = vmul.f32 %v1288, %v1096
    %v1353 = vmul.f32 %v1289, %v1097
    %v1354 = vmul.f32 %v1290, %v1098
    %v1355 = vmul.f32 %v1291, %v1099
    %v1356 = vmul.f32 %v1292, %v1100
    %v1357 = vmul.f32 %v1293, %v1101
    %v1358 = vmul.f32 %v1294, %v1102
    %v1359 = vmul.f32 %v1295, %v1103
    %v1360 = vmul.f32 %v1296, %v1104
    %v1361 = vmul.f32 %v1297, %v1105
    %v1362 = vmul.f32 %v1298, %v1106
    %v1363 = vmul.f32 %v1299, %v1107
    %v1364 = vmul.f32 %v1300, %v1108
    %v1365 = vmul.f32 %v1301, %v1109
    %v1366 = vmul.f32 %v1302, %v1110
    %v1367 = vmul.f32 %v1303, %v1111
    %v1368 = vmul.f32 %v1304, %v1112
    %v1369 = vmul.f32 %v1305, %v1113
    %v1370 = vmul.f32 %v1306, %v1114
    %v1371 = vmul.f32 %v1307, %v1115
    %v1372 = vmul.f32 %v1308, %v1116
    %v1373 = vmul.f32 %v1309, %v1117
    %v1374 = vmul.f32 %v1310, %v1118
    %v1375 = vmul.f32 %v1311, %v1119
    %v1376 = vmul.f32 %v1312, %v1120
    %v1377 = vmul.f32 %v1313, %v1121
    %v1378 = vmul.f32 %v1314, %v1122
    %v1379 = vmul.f32 %v1315, %v1123
    %v1380 = vmul.f32 %v1316, %v1124
    %v1381 = vmul.f32 %v1317, %v1125
    %v1382 = vmul.f32 %v1318, %v1126
    %v1383 = vmul.f32 %v1319, %v1127
    %v1384 = vmul.f32 %v1320, %v1128
    %v1385 = vmul.f32 %v1321, %v1129
    %v1386 = vmul.f32 %v1322, %v1130
    %v1387 = vmul.f32 %v1323, %v1131
    %v1388 = vmul.f32 %v1324, %v1132
    %v1389 = vmul.f32 %v1325, %v1133
    %v1390 = vmul.f32 %v1326, %v1134
    %v1391 = vadd.f32 %v1135, %v1327
    %v1392 = vadd.f32 %v1136, %v1328
    %v1393 = vadd.f32 %v1137, %v1329
    %v1394 = vadd.f32 %v1138, %v1330
    %v1395 = vadd.f32 %v1139, %v1331
    %v1396 = vadd.f32 %v1140, %v1332
    %v1397 = vadd.f32 %v1141, %v1333
    %v1398 = vadd.f32 %v1142, %v1334
    %v1399 = vadd.f32 %v1143, %v1335
    %v1400 = vadd.f32 %v1144, %v1336
    %v1401 = vadd.f32 %v1145, %v1337
    %v1402 = vadd.f32 %v1146, %v1338
    %v1403 = vadd.f32 %v1147, %v1339
    %v1404 = vadd.f32 %v1148, %v1340
    %v1405 = vadd.f32 %v1149, %v1341
    %v1406 = vadd.f32 %v1150, %v1342
    %v1407 = vadd.f32 %v1151, %v1343
    %v1408 = vadd.f32 %v1152, %v1344
    %v1409 = vadd.f32 %v1153, %v1345
    %v1410 = vadd.f32 %v1154, %v1346
    %v1411 = vadd.f32 %v1155, %v1347
    %v1412 = vadd.f32 %v1156, %v1348
    %v1413 = vadd.f32 %v1157, %v1349
    %v1414 = vadd.f32 %v1158, %v1350
    %v1415 = vadd.f32 %v1159, %v1351
    %v1416 = vadd.f32 %v1160, %v1352
    %v1417 = vadd.f32 %v1161, %v1353
    %v1418 = vadd.f32 %v1162, %v1354
    %v1419 = vadd.f32 %v1163, %v1355
    %v1420 = vadd.f32 %v1164, %v1356
    %v1421 = vadd.f32 %v1165, %v1357
    %v1422 = vadd.f32 %v1166, %v1358
    %v1423 = vadd.f32 %v1167, %v1359
    %v1424 = vadd.f32 %v1168, %v1360
    %v1425 = vadd.f32 %v1169, %v1361
    %v1426 = vadd.f32 %v1170, %v1362
    %v1427 = vadd.f32 %v1171, %v1363
    %v1428 = vadd.f32 %v1172, %v1364
    %v1429 = vadd.f32 %v1173, %v1365
    %v1430 = vadd.f32 %v1174, %v1366
    %v1431 = vadd.f32 %v1175, %v1367
    %v1432 = vadd.f32 %v1176, %v1368
    %v1433 = vadd.f32 %v1177, %v1369
    %v1434 = vadd.f32 %v1178, %v1370
    %v1435 = vadd.f32 %v1179, %v1371
    %v1436 = vadd.f32 %v1180, %v1372
    %v1437 = vadd.f32 %v1181, %v1373
    %v1438 = vadd.f32 %v1182, %v1374
    %v1439 = vadd.f32 %v1183, %v1375
    %v1440 = vadd.f32 %v1184, %v1376
    %v1441 = vadd.f32 %v1185, %v1377
    %v1442 = vadd.f32 %v1186, %v1378
    %v1443 = vadd.f32 %v1187, %v1379
    %v1444 = vadd.f32 %v1188, %v1380
    %v1445 = vadd.f32 %v1189, %v1381
    %v1446 = vadd.f32 %v1190, %v1382
    %v1447 = vadd.f32 %v1191, %v1383
    %v1448 = vadd.f32 %v1192, %v1384
    %v1449 = vadd.f32 %v1193, %v1385
    %v1450 = vadd.f32 %v1194, %v1386
    %v1451 = vadd.f32 %v1195, %v1387
    %v1452 = vadd.f32 %v1196, %v1388
    %v1453 = vadd.f32 %v1197, %v1389
    %v1454 = vadd.f32 %v1198, %v1390
    %v1455 = vmul.f32 %v1391, 0.5
    %v1456 = vmul.f32 %v1392, 0.5
    %v1457 = vmul.f32 %v1393, 0.5
    %v1458 = vmul.f32 %v1394, 0.5
    %v1459 = vmul.f32 %v1395, 0.5
    %v1460 = vmul.f32 %v1396, 0.5
    %v1461 = vmul.f32 %v1397, 0.5
    %v1462 = vmul.f32 %v1398, 0.5
    %v1463 = vmul.f32 %v1399, 0.5
    %v1464 = vmul.f32 %v1400, 0.5
    %v1465 = vmul.f32 %v1401, 0.5
    %v1466 = vmul.f32 %v1402, 0.5
    %v1467 = vmul.f32 %v1403, 0.5
    %v1468 = vmul.f32 %v1404, 0.5
    %v1469 = vmul.f32 %v1405, 0.5
    %v1470 = vmul.f32 %v1406, 0.5
    %v1471 = vmul.f32 %v1407, 0.5
    %v1472 = vmul.f32 %v1408, 0.5
    %v1473 = vmul.f32 %v1409, 0.5
    %v1474 = vmul.f32 %v1410, 0.5
    %v1475 = vmul.f32 %v1411, 0.5
    %v1476 = vmul.f32 %v1412, 0.5
    %v1477 = vmul.f32 %v1413, 0.5
    %v1478 = vmul.f32 %v1414, 0.5
    %v1479 = vmul.f32 %v1415, 0.5
    %v1480 = vmul.f32 %v1416, 0.5
    %v1481 = vmul.f32 %v1417, 0.5
    %v1482 = vmul.f32 %v1418, 0.5
    %v1483 = vmul.f32 %v1419, 0.5
    %v1484 = vmul.f32 %v1420, 0.5
    %v1485 = vmul.f32 %v1421, 0.5
    %v1486 = vmul.f32 %v1422, 0.5
    %v1487 = vmul.f32 %v1423, 0.5
    %v1488 = vmul.f32 %v1424, 0.5
    %v1489 = vmul.f32 %v1425, 0.5
    %v1490 = vmul.f32 %v1426, 0.5
    %v1491 = vmul.f32 %v1427, 0.5
    %v1492 = vmul.f32 %v1428, 0.5
    %v1493 = vmul.f32 %v1429, 0.5
    %v1494 = vmul.f32 %v1430, 0.5
    %v1495 = vmul.f32 %v1431, 0.5
    %v1496 = vmul.f32 %v1432, 0.5
    %v1497 = vmul.f32 %v1433, 0.5
    %v1498 = vmul.f32 %v1434, 0.5
    %v1499 = vmul.f32 %v1435, 0.5
    %v1500 = vmul.f32 %v1436, 0.5
    %v1501 = vmul.f32 %v1437, 0.5
    %v1502 = vmul.f32 %v1438, 0.5
    %v1503 = vmul.f32 %v1439, 0.5
    %v1504 = vmul.f32 %v1440, 0.5
    %v1505 = vmul.f32 %v1441, 0.5
    %v1506 = vmul.f32 %v1442, 0.5
    %v1507 = vmul.f32 %v1443, 0.5
    %v1508 = vmul.f32 %v1444, 0.5
    %v1509 = vmul.f32 %v1445, 0.5
    %v1510 = vmul.f32 %v1446, 0.5
    %v1511 = vmul.f32 %v1447, 0.5
    %v1512 = vmul.f32 %v1448, 0.5
    %v1513 = vmul.f32 %v1449, 0.5
    %v1514 = vmul.f32 %v1450, 0.5
    %v1515 = vmul.f32 %v1451, 0.5
    %v1516 = vmul.f32 %v1452, 0.5
    %v1517 = vmul.f32 %v1453, 0.5
    %v1518 = vmul.f32 %v1454, 0.5
    %v1519 = vlaneseq
    %v1520 = vshrl.u32 %v1519, 7
    %v1521 = vadd.s32 %v1520, 8
    %v1522 = vadd.s32 %v1520, 16
    %v1523 = vadd.s32 %v1520, 24
    %v1524 = vadd.s32 %v1520, 32
    %v1525 = vadd.s32 %v1520, 40
    %v1526 = vadd.s32 %v1520, 48
    %v1527 = vadd.s32 %v1520, 56
    %v1528 = vadd.s32 %v1520, 64
    %v1529 = vadd.s32 %v1520, 72
    %v1530 = vadd.s32 %v1520, 80
    %v1531 = vadd.s32 %v1520, 88
    %v1532 = vadd.s32 %v1520, 96
    %v1533 = vadd.s32 %v1520, 104
    %v1534 = vadd.s32 %v1520, 112
    %v1535 = vadd.s32 %v1520, 120
    %v1536 = vadd.s32 %v1520, 128
    %v1537 = vadd.s32 %v1520, 136
    %v1538 = vadd.s32 %v1520, 144
    %v1539 = vadd.s32 %v1520, 152
    %v1540 = vadd.s32 %v1520, 160
    %v1541 = vadd.s32 %v1520, 168
    %v1542 = vadd.s32 %v1520, 176
    %v1543 = vadd.s32 %v1520, 184
    %v1544 = vadd.s32 %v1520, 192
    %v1545 = vadd.s32 %v1520, 200
    %v1546 = vadd.s32 %v1520, 208
    %v1547 = vadd.s32 %v1520, 216
    %v1548 = vadd.s32 %v1520, 224
    %v1549 = vadd.s32 %v1520, 232
    %v1550 = vadd.s32 %v1520, 240
    %v1551 = vadd.s32 %v1520, 248
    %v1552 = vadd.s32 %v1520, 256
    %v1553 = vadd.s32 %v1520, 264
    %v1554 = vadd.s32 %v1520, 272
    %v1555 = vadd.s32 %v1520, 280
    %v1556 = vadd.s32 %v1520, 288
    %v1557 = vadd.s32 %v1520, 296
    %v1558 = vadd.s32 %v1520, 304
    %v1559 = vadd.s32 %v1520, 312
    %v1560 = vadd.s32 %v1520, 320
    %v1561 = vadd.s32 %v1520, 328
    %v1562 = vadd.s32 %v1520, 336
    %v1563 = vadd.s32 %v1520, 344
    %v1564 = vadd.s32 %v1520, 352
    %v1565 = vadd.s32 %v1520, 360
    %v1566 = vadd.s32 %v1520, 368
    %v1567 = vadd.s32 %v1520, 376
    %v1568 = vadd.s32 %v1520, 384
    %v1569 = vadd.s32 %v1520, 392
    %v1570 = vadd.s32 %v1520, 400
    %v1571 = vadd.s32 %v1520, 408
    %v1572 = vadd.s32 %v1520, 416
    %v1573 = vadd.s32 %v1520, 424
    %v1574 = vadd.s32 %v1520, 432
    %v1575 = vadd.s32 %v1520, 440
    %v1576 = vadd.s32 %v1520, 448
    %v1577 = vadd.s32 %v1520, 456
    %v1578 = vadd.s32 %v1520, 464
    %v1579 = vadd.s32 %v1520, 472
    %v1580 = vadd.s32 %v1520, 480
    %v1581 = vadd.s32 %v1520, 488
    %v1582 = vadd.s32 %v1520, 496
    %v1583 = vadd.s32 %v1520, 504
    %v1584 = vstv 0
    %v1585 = vadd.s32 %v1584, %v1520
    %v1586 = vadd.s32 %v1584, %v1521
    %v1587 = vadd.s32 %v1584, %v1522
    %v1588 = vadd.s32 %v1584, %v1523
    %v1589 = vadd.s32 %v1584, %v1524
    %v1590 = vadd.s32 %v1584, %v1525
    %v1591 = vadd.s32 %v1584, %v1526
    %v1592 = vadd.s32 %v1584, %v1527
    %v1593 = vadd.s32 %v1584, %v1528
    %v1594 = vadd.s32 %v1584, %v1529
    %v1595 = vadd.s32 %v1584, %v1530
    %v1596 = vadd.s32 %v1584, %v1531
    %v1597 = vadd.s32 %v1584, %v1532
    %v1598 = vadd.s32 %v1584, %v1533
    %v1599 = vadd.s32 %v1584, %v1534
    %v1600 = vadd.s32 %v1584, %v1535
    %v1601 = vadd.s32 %v1584, %v1536
    %v1602 = vadd.s32 %v1584, %v1537
    %v1603 = vadd.s32 %v1584, %v1538
    %v1604 = vadd.s32 %v1584, %v1539
    %v1605 = vadd.s32 %v1584, %v1540
    %v1606 = vadd.s32 %v1584, %v1541
    %v1607 = vadd.s32 %v1584, %v1542
    %v1608 = vadd.s32 %v1584, %v1543
    %v1609 = vadd.s32 %v1584, %v1544
    %v1610 = vadd.s32 %v1584, %v1545
    %v1611 = vadd.s32 %v1584, %v1546
    %v1612 = vadd.s32 %v1584, %v1547
    %v1613 = vadd.s32 %v1584, %v1548
    %v1614 = vadd.s32 %v1584, %v1549
    %v1615 = vadd.s32 %v1584, %v1550
    %v1616 = vadd.s32 %v1584, %v1551
    %v1617 = vadd.s32 %v1584, %v1552
    %v1618 = vadd.s32 %v1584, %v1553
    %v1619 = vadd.s32 %v1584, %v1554
    %v1620 = vadd.s32 %v1584, %v1555
    %v1621 = vadd.s32 %v1584, %v1556
    %v1622 = vadd.s32 %v1584, %v1557
    %v1623 = vadd.s32 %v1584, %v1558
    %v1624 = vadd.s32 %v1584, %v1559
    %v1625 = vadd.s32 %v1584, %v1560
    %v1626 = vadd.s32 %v1584, %v1561
    %v1627 = vadd.s32 %v1584, %v1562
    %v1628 = vadd.s32 %v1584, %v1563
    %v1629 = vadd.s32 %v1584, %v1564
    %v1630 = vadd.s32 %v1584, %v1565
    %v1631 = vadd.s32 %v1584, %v1566
    %v1632 = vadd.s32 %v1584, %v1567
    %v1633 = vadd.s32 %v1584, %v1568
    %v1634 = vadd.s32 %v1584, %v1569
    %v1635 = vadd.s32 %v1584, %v1570
    %v1636 = vadd.s32 %v1584, %v1571
    %v1637 = vadd.s32 %v1584, %v1572
    %v1638 = vadd.s32 %v1584, %v1573
    %v1639 = vadd.s32 %v1584, %v1574
    %v1640 = vadd.s32 %v1584, %v1575
    %v1641 = vadd.s32 %v1584, %v1576
    %v1642 = vadd.s32 %v1584, %v1577
    %v1643 = vadd.s32 %v1584, %v1578
    %v1644 = vadd.s32 %v1584, %v1579
    %v1645 = vadd.s32 %v1584, %v1580
    %v1646 = vadd.s32 %v1584, %v1581
    %v1647 = vadd.s32 %v1584, %v1582
    %v1648 = vadd.s32 %v1584, %v1583
    %v1649 = vstv %s46
    %vm1650 = vcmp.lt.s32.totalorder %v1585, %v1649
    %vm1651 = vcmp.lt.s32.totalorder %v1586, %v1649
    %vm1652 = vcmp.lt.s32.totalorder %v1587, %v1649
    %vm1653 = vcmp.lt.s32.totalorder %v1588, %v1649
    %vm1654 = vcmp.lt.s32.totalorder %v1589, %v1649
    %vm1655 = vcmp.lt.s32.totalorder %v1590, %v1649
    %vm1656 = vcmp.lt.s32.totalorder %v1591, %v1649
    %vm1657 = vcmp.lt.s32.totalorder %v1592, %v1649
    %vm1658 = vcmp.lt.s32.totalorder %v1593, %v1649
    %vm1659 = vcmp.lt.s32.totalorder %v1594, %v1649
    %vm1660 = vcmp.lt.s32.totalorder %v1595, %v1649
    %vm1661 = vcmp.lt.s32.totalorder %v1596, %v1649
    %vm1662 = vcmp.lt.s32.totalorder %v1597, %v1649
    %vm1663 = vcmp.lt.s32.totalorder %v1598, %v1649
    %vm1664 = vcmp.lt.s32.totalorder %v1599, %v1649
    %vm1665 = vcmp.lt.s32.totalorder %v1600, %v1649
    %vm1666 = vcmp.lt.s32.totalorder %v1601, %v1649
    %vm1667 = vcmp.lt.s32.totalorder %v1602, %v1649
    %vm1668 = vcmp.lt.s32.totalorder %v1603, %v1649
    %vm1669 = vcmp.lt.s32.totalorder %v1604, %v1649
    %vm1670 = vcmp.lt.s32.totalorder %v1605, %v1649
    %vm1671 = vcmp.lt.s32.totalorder %v1606, %v1649
    %vm1672 = vcmp.lt.s32.totalorder %v1607, %v1649
    %vm1673 = vcmp.lt.s32.totalorder %v1608, %v1649
    %vm1674 = vcmp.lt.s32.totalorder %v1609, %v1649
    %vm1675 = vcmp.lt.s32.totalorder %v1610, %v1649
    %vm1676 = vcmp.lt.s32.totalorder %v1611, %v1649
    %vm1677 = vcmp.lt.s32.totalorder %v1612, %v1649
    %vm1678 = vcmp.lt.s32.totalorder %v1613, %v1649
    %vm1679 = vcmp.lt.s32.totalorder %v1614, %v1649
    %vm1680 = vcmp.lt.s32.totalorder %v1615, %v1649
    %vm1681 = vcmp.lt.s32.totalorder %v1616, %v1649
    %vm1682 = vcmp.lt.s32.totalorder %v1617, %v1649
    %vm1683 = vcmp.lt.s32.totalorder %v1618, %v1649
    %vm1684 = vcmp.lt.s32.totalorder %v1619, %v1649
    %vm1685 = vcmp.lt.s32.totalorder %v1620, %v1649
    %vm1686 = vcmp.lt.s32.totalorder %v1621, %v1649
    %vm1687 = vcmp.lt.s32.totalorder %v1622, %v1649
    %vm1688 = vcmp.lt.s32.totalorder %v1623, %v1649
    %vm1689 = vcmp.lt.s32.totalorder %v1624, %v1649
    %vm1690 = vcmp.lt.s32.totalorder %v1625, %v1649
    %vm1691 = vcmp.lt.s32.totalorder %v1626, %v1649
    %vm1692 = vcmp.lt.s32.totalorder %v1627, %v1649
    %vm1693 = vcmp.lt.s32.totalorder %v1628, %v1649
    %vm1694 = vcmp.lt.s32.totalorder %v1629, %v1649
    %vm1695 = vcmp.lt.s32.totalorder %v1630, %v1649
    %vm1696 = vcmp.lt.s32.totalorder %v1631, %v1649
    %vm1697 = vcmp.lt.s32.totalorder %v1632, %v1649
    %vm1698 = vcmp.lt.s32.totalorder %v1633, %v1649
    %vm1699 = vcmp.lt.s32.totalorder %v1634, %v1649
    %vm1700 = vcmp.lt.s32.totalorder %v1635, %v1649
    %vm1701 = vcmp.lt.s32.totalorder %v1636, %v1649
    %vm1702 = vcmp.lt.s32.totalorder %v1637, %v1649
    %vm1703 = vcmp.lt.s32.totalorder %v1638, %v1649
    %vm1704 = vcmp.lt.s32.totalorder %v1639, %v1649
    %vm1705 = vcmp.lt.s32.totalorder %v1640, %v1649
    %vm1706 = vcmp.lt.s32.totalorder %v1641, %v1649
    %vm1707 = vcmp.lt.s32.totalorder %v1642, %v1649
    %vm1708 = vcmp.lt.s32.totalorder %v1643, %v1649
    %vm1709 = vcmp.lt.s32.totalorder %v1644, %v1649
    %vm1710 = vcmp.lt.s32.totalorder %v1645, %v1649
    %vm1711 = vcmp.lt.s32.totalorder %v1646, %v1649
    %vm1712 = vcmp.lt.s32.totalorder %v1647, %v1649
    %vm1713 = vcmp.lt.s32.totalorder %v1648, %v1649
    %v1714 = vsel %vm1650, %v1455, 0.0
    %v1715 = vsel %vm1651, %v1456, 0.0
    %v1716 = vsel %vm1652, %v1457, 0.0
    %v1717 = vsel %vm1653, %v1458, 0.0
    %v1718 = vsel %vm1654, %v1459, 0.0
    %v1719 = vsel %vm1655, %v1460, 0.0
    %v1720 = vsel %vm1656, %v1461, 0.0
    %v1721 = vsel %vm1657, %v1462, 0.0
    %v1722 = vsel %vm1658, %v1463, 0.0
    %v1723 = vsel %vm1659, %v1464, 0.0
    %v1724 = vsel %vm1660, %v1465, 0.0
    %v1725 = vsel %vm1661, %v1466, 0.0
    %v1726 = vsel %vm1662, %v1467, 0.0
    %v1727 = vsel %vm1663, %v1468, 0.0
    %v1728 = vsel %vm1664, %v1469, 0.0
    %v1729 = vsel %vm1665, %v1470, 0.0
    %v1730 = vsel %vm1666, %v1471, 0.0
    %v1731 = vsel %vm1667, %v1472, 0.0
    %v1732 = vsel %vm1668, %v1473, 0.0
    %v1733 = vsel %vm1669, %v1474, 0.0
    %v1734 = vsel %vm1670, %v1475, 0.0
    %v1735 = vsel %vm1671, %v1476, 0.0
    %v1736 = vsel %vm1672, %v1477, 0.0
    %v1737 = vsel %vm1673, %v1478, 0.0
    %v1738 = vsel %vm1674, %v1479, 0.0
    %v1739 = vsel %vm1675, %v1480, 0.0
    %v1740 = vsel %vm1676, %v1481, 0.0
    %v1741 = vsel %vm1677, %v1482, 0.0
    %v1742 = vsel %vm1678, %v1483, 0.0
    %v1743 = vsel %vm1679, %v1484, 0.0
    %v1744 = vsel %vm1680, %v1485, 0.0
    %v1745 = vsel %vm1681, %v1486, 0.0
    %v1746 = vsel %vm1682, %v1487, 0.0
    %v1747 = vsel %vm1683, %v1488, 0.0
    %v1748 = vsel %vm1684, %v1489, 0.0
    %v1749 = vsel %vm1685, %v1490, 0.0
    %v1750 = vsel %vm1686, %v1491, 0.0
    %v1751 = vsel %vm1687, %v1492, 0.0
    %v1752 = vsel %vm1688, %v1493, 0.0
    %v1753 = vsel %vm1689, %v1494, 0.0
    %v1754 = vsel %vm1690, %v1495, 0.0
    %v1755 = vsel %vm1691, %v1496, 0.0
    %v1756 = vsel %vm1692, %v1497, 0.0
    %v1757 = vsel %vm1693, %v1498, 0.0
    %v1758 = vsel %vm1694, %v1499, 0.0
    %v1759 = vsel %vm1695, %v1500, 0.0
    %v1760 = vsel %vm1696, %v1501, 0.0
    %v1761 = vsel %vm1697, %v1502, 0.0
    %v1762 = vsel %vm1698, %v1503, 0.0
    %v1763 = vsel %vm1699, %v1504, 0.0
    %v1764 = vsel %vm1700, %v1505, 0.0
    %v1765 = vsel %vm1701, %v1506, 0.0
    %v1766 = vsel %vm1702, %v1507, 0.0
    %v1767 = vsel %vm1703, %v1508, 0.0
    %v1768 = vsel %vm1704, %v1509, 0.0
    %v1769 = vsel %vm1705, %v1510, 0.0
    %v1770 = vsel %vm1706, %v1511, 0.0
    %v1771 = vsel %vm1707, %v1512, 0.0
    %v1772 = vsel %vm1708, %v1513, 0.0
    %v1773 = vsel %vm1709, %v1514, 0.0
    %v1774 = vsel %vm1710, %v1515, 0.0
    %v1775 = vsel %vm1711, %v1516, 0.0
    %v1776 = vsel %vm1712, %v1517, 0.0
    %v1777 = vsel %vm1713, %v1518, 0.0
    %vm1778 = vcmask 7168
    %v1779 = vsel %vm1778, %v1714, 0.0
    %v1780 = vsel %vm1778, %v1715, 0.0
    %v1781 = vadd.f32 %v1779, %v1780
    %v1782 = vsel %vm1778, %v1716, 0.0
    %v1783 = vadd.f32 %v1781, %v1782
    %v1784 = vsel %vm1778, %v1717, 0.0
    %v1785 = vadd.f32 %v1783, %v1784
    %v1786 = vsel %vm1778, %v1718, 0.0
    %v1787 = vadd.f32 %v1785, %v1786
    %v1788 = vsel %vm1778, %v1719, 0.0
    %v1789 = vadd.f32 %v1787, %v1788
    %v1790 = vsel %vm1778, %v1720, 0.0
    %v1791 = vadd.f32 %v1789, %v1790
    %v1792 = vsel %vm1778, %v1721, 0.0
    %v1793 = vadd.f32 %v1791, %v1792
    %v1794 = vsel %vm1778, %v1722, 0.0
    %v1795 = vadd.f32 %v1793, %v1794
    %v1796 = vsel %vm1778, %v1723, 0.0
    %v1797 = vadd.f32 %v1795, %v1796
    %v1798 = vsel %vm1778, %v1724, 0.0
    %v1799 = vadd.f32 %v1797, %v1798
    %v1800 = vsel %vm1778, %v1725, 0.0
    %v1801 = vadd.f32 %v1799, %v1800
    %v1802 = vsel %vm1778, %v1726, 0.0
    %v1803 = vadd.f32 %v1801, %v1802
    %v1804 = vsel %vm1778, %v1727, 0.0
    %v1805 = vadd.f32 %v1803, %v1804
    %v1806 = vsel %vm1778, %v1728, 0.0
    %v1807 = vadd.f32 %v1805, %v1806
    %v1808 = vsel %vm1778, %v1729, 0.0
    %v1809 = vadd.f32 %v1807, %v1808
    %v1810 = vsel %vm1778, %v1730, 0.0
    %v1811 = vadd.f32 %v1809, %v1810
    %v1812 = vsel %vm1778, %v1731, 0.0
    %v1813 = vadd.f32 %v1811, %v1812
    %v1814 = vsel %vm1778, %v1732, 0.0
    %v1815 = vadd.f32 %v1813, %v1814
    %v1816 = vsel %vm1778, %v1733, 0.0
    %v1817 = vadd.f32 %v1815, %v1816
    %v1818 = vsel %vm1778, %v1734, 0.0
    %v1819 = vadd.f32 %v1817, %v1818
    %v1820 = vsel %vm1778, %v1735, 0.0
    %v1821 = vadd.f32 %v1819, %v1820
    %v1822 = vsel %vm1778, %v1736, 0.0
    %v1823 = vadd.f32 %v1821, %v1822
    %v1824 = vsel %vm1778, %v1737, 0.0
    %v1825 = vadd.f32 %v1823, %v1824
    %v1826 = vsel %vm1778, %v1738, 0.0
    %v1827 = vadd.f32 %v1825, %v1826
    %v1828 = vsel %vm1778, %v1739, 0.0
    %v1829 = vadd.f32 %v1827, %v1828
    %v1830 = vsel %vm1778, %v1740, 0.0
    %v1831 = vadd.f32 %v1829, %v1830
    %v1832 = vsel %vm1778, %v1741, 0.0
    %v1833 = vadd.f32 %v1831, %v1832
    %v1834 = vsel %vm1778, %v1742, 0.0
    %v1835 = vadd.f32 %v1833, %v1834
    %v1836 = vsel %vm1778, %v1743, 0.0
    %v1837 = vadd.f32 %v1835, %v1836
    %v1838 = vsel %vm1778, %v1744, 0.0
    %v1839 = vadd.f32 %v1837, %v1838
    %v1840 = vsel %vm1778, %v1745, 0.0
    %v1841 = vadd.f32 %v1839, %v1840
    %v1842 = vsel %vm1778, %v1746, 0.0
    %v1843 = vadd.f32 %v1841, %v1842
    %v1844 = vsel %vm1778, %v1747, 0.0
    %v1845 = vadd.f32 %v1843, %v1844
    %v1846 = vsel %vm1778, %v1748, 0.0
    %v1847 = vadd.f32 %v1845, %v1846
    %v1848 = vsel %vm1778, %v1749, 0.0
    %v1849 = vadd.f32 %v1847, %v1848
    %v1850 = vsel %vm1778, %v1750, 0.0
    %v1851 = vadd.f32 %v1849, %v1850
    %v1852 = vsel %vm1778, %v1751, 0.0
    %v1853 = vadd.f32 %v1851, %v1852
    %v1854 = vsel %vm1778, %v1752, 0.0
    %v1855 = vadd.f32 %v1853, %v1854
    %v1856 = vsel %vm1778, %v1753, 0.0
    %v1857 = vadd.f32 %v1855, %v1856
    %v1858 = vsel %vm1778, %v1754, 0.0
    %v1859 = vadd.f32 %v1857, %v1858
    %v1860 = vsel %vm1778, %v1755, 0.0
    %v1861 = vadd.f32 %v1859, %v1860
    %v1862 = vsel %vm1778, %v1756, 0.0
    %v1863 = vadd.f32 %v1861, %v1862
    %v1864 = vsel %vm1778, %v1757, 0.0
    %v1865 = vadd.f32 %v1863, %v1864
    %v1866 = vsel %vm1778, %v1758, 0.0
    %v1867 = vadd.f32 %v1865, %v1866
    %v1868 = vsel %vm1778, %v1759, 0.0
    %v1869 = vadd.f32 %v1867, %v1868
    %v1870 = vsel %vm1778, %v1760, 0.0
    %v1871 = vadd.f32 %v1869, %v1870
    %v1872 = vsel %vm1778, %v1761, 0.0
    %v1873 = vadd.f32 %v1871, %v1872
    %v1874 = vsel %vm1778, %v1762, 0.0
    %v1875 = vadd.f32 %v1873, %v1874
    %v1876 = vsel %vm1778, %v1763, 0.0
    %v1877 = vadd.f32 %v1875, %v1876
    %v1878 = vsel %vm1778, %v1764, 0.0
    %v1879 = vadd.f32 %v1877, %v1878
    %v1880 = vsel %vm1778, %v1765, 0.0
    %v1881 = vadd.f32 %v1879, %v1880
    %v1882 = vsel %vm1778, %v1766, 0.0
    %v1883 = vadd.f32 %v1881, %v1882
    %v1884 = vsel %vm1778, %v1767, 0.0
    %v1885 = vadd.f32 %v1883, %v1884
    %v1886 = vsel %vm1778, %v1768, 0.0
    %v1887 = vadd.f32 %v1885, %v1886
    %v1888 = vsel %vm1778, %v1769, 0.0
    %v1889 = vadd.f32 %v1887, %v1888
    %v1890 = vsel %vm1778, %v1770, 0.0
    %v1891 = vadd.f32 %v1889, %v1890
    %v1892 = vsel %vm1778, %v1771, 0.0
    %v1893 = vadd.f32 %v1891, %v1892
    %v1894 = vsel %vm1778, %v1772, 0.0
    %v1895 = vadd.f32 %v1893, %v1894
    %v1896 = vsel %vm1778, %v1773, 0.0
    %v1897 = vadd.f32 %v1895, %v1896
    %v1898 = vsel %vm1778, %v1774, 0.0
    %v1899 = vadd.f32 %v1897, %v1898
    %v1900 = vsel %vm1778, %v1775, 0.0
    %v1901 = vadd.f32 %v1899, %v1900
    %v1902 = vsel %vm1778, %v1776, 0.0
    %v1903 = vadd.f32 %v1901, %v1902
    %v1904 = vsel %vm1778, %v1777, 0.0
    %v1905 = vadd.f32 %v1903, %v1904
    %v1906 = vrot.slane %v1905, 4
    %v1907 = vadd.f32 %v1905, %v1906
    %v1908 = vrot.slane %v1907, 2
    %v1909 = vadd.f32 %v1907, %v1908
    %v1910 = vrot.slane %v1909, 1
    %v1911 = vadd.f32 %v1909, %v1910
    %v1912 = vadd.f32 %v1911, 0.0
    %1914 = vset.pattern.permute.xlu0 0
    %1915 = vperm.xlu0 %1914, %v1912
    %v1916 = vpop.permute.xlu0 %1915
    %1918 = vst [vmem:[#allocation7] sm:$0xff] %v1916
    // Predicated region
    $region22: #{tpu_custom_call.1} parent=1 // pred_check
      _
    $region23: #{tpu_custom_call.1} parent=1 // pred_check_branch
      %1920 = sbr.rel (0) target = $region25
    $region24: #{tpu_custom_call.1} parent=1 // pred_region
      %s1922 = ssub.s32 128, 128
      %1923 = vsyncadd [#allocation4], %s1922
      %s1925 = sshll.u32 [#allocation7], 4
      %s1926 = int_to_ptr.vmem [resolvable:$true] %s1925
      %1928 = dma.vmem_to_hbm [thread:$0]  %s1926, 128, %s3, [#allocation4]
    $region25: #{tpu_custom_call.1} parent=1 // pred_fallthru
      _
    // Predicated region
    $region26: #{tpu_custom_call.1} parent=1 // pred_check
      _
    $region27: #{tpu_custom_call.1} parent=1 // pred_check_branch
      %1930 = sbr.rel (0) target = $region29
    $region28: #{tpu_custom_call.1} parent=1 // pred_region
      %1931 = dma.done [#allocation4], 128
    $region29: #{tpu_custom_call.1} parent=1 // pred_fallthru
      _
    %1932 = vsyncpa [#allocation3], 1
    %1933 = vsyncpa [#allocation6], 1
    %1934 = vsyncpa [#allocation4], 1

</llo_original>
